<compile_context>
chip_gen: v7x
topology: tpu7x:2x2x1
jax: 0.10.0
libtpu: 0.0.40
codegen_flags: <defaults>
</compile_context>

<pallas_src>
import functools

import jax
import jax.numpy as jnp
from jax.experimental import pallas as pl
from jax.experimental.pallas import tpu as pltpu


# ------------------------------ configuration ------------------------------

LATENT_DIM = 64                           # option.latent_dim (chosen, documented)
IMAGE_SHAPE = (1, 16, 16)                 # image_shape (C, H, W)
OUT_FEATURES = IMAGE_SHAPE[0] * IMAGE_SHAPE[1] * IMAGE_SHAPE[2]   # 256
DIMS = [LATENT_DIM, 128, 256, 512, 1024, OUT_FEATURES]
BN_FEATURES = (256, 512, 1024)
BN_EPS = 0.8
LRELU_SLOPE = 0.2


# ------------------------------- fused kernel ------------------------------

def _generator_fused_kernel(
    z_ref,
    w1_ref, b1_ref,
    w2_ref, g2_ref, be2_ref,
    w3_ref, g3_ref, be3_ref,
    w4_hbm, g4_ref, be4_ref,
    w5_hbm, b5_ref,
    o_ref,
    w4_buf, w5_buf, dma_sems,
    *, eps, slope,
):
    """Entire generator MLP in one kernel; activations stay resident in VMEM.

    w4/w5 arrive as raw HBM refs (memory_space=pl.ANY) and are prefetched into
    VMEM scratch at the top of the body so their DMA overlaps layers 1-3.
    """
    # Kick off the two large-weight DMAs immediately.
    cp_w4 = pltpu.make_async_copy(w4_hbm, w4_buf, dma_sems.at[0])
    cp_w5 = pltpu.make_async_copy(w5_hbm, w5_buf, dma_sems.at[1])
    cp_w4.start()
    cp_w5.start()

    def matmul(x_f32, w_ref):
        # bf16 x bf16 on the MXU, f32 accumulation.
        return jnp.dot(x_f32.astype(w_ref.dtype), w_ref[...],
                       preferred_element_type=jnp.float32)

    def lrelu(y):
        # LeakyReLU(0.2): max(y, 0.2*y) — single VPU max instead of cmp+select.
        return jnp.maximum(y, slope * y)

    def bnorm(y, g_ref, be_ref):
        # Training-mode BatchNorm1d: biased batch variance, eps inside rsqrt.
        # gamma is folded into the (1, N) rsqrt scale before broadcasting.
        mean = jnp.mean(y, axis=0, keepdims=True)
        diff = y - mean
        var = jnp.mean(diff * diff, axis=0, keepdims=True)
        inv = jax.lax.rsqrt(var + eps) * g_ref[...]
        return diff * inv + be_ref[...]

    h = lrelu(matmul(z_ref[...], w1_ref) + b1_ref[...])             # (B, 128)
    # Linear bias cancels exactly under training-mode BN (y - mean); dropped.
    h = lrelu(bnorm(matmul(h, w2_ref), g2_ref, be2_ref))            # (B, 256)
    h = lrelu(bnorm(matmul(h, w3_ref), g3_ref, be3_ref))            # (B, 512)
    cp_w4.wait()
    h = lrelu(bnorm(matmul(h, w4_buf), g4_ref, be4_ref))            # (B, 1024)
    cp_w5.wait()
    o_ref[...] = jnp.tanh(matmul(h, w5_buf) + b5_ref[...])          # (B, 256)


# ------------------------------ call wrapper --------------------------------

def generator_forward(z, params):
    B = z.shape[0]
    # Full-batch BN stats with no masking: the batch must fill whole f32
    # sublane tiles so no padded rows enter the mean/variance.
    assert B % 8 == 0, "batch must be a multiple of 8 (sublane tile)"

    p1, p2, p3, p4, p5 = params
    flat = [
        z,
        p1["w"], p1["b"],
        p2["w"], p2["gamma"], p2["beta"],
        p3["w"], p3["gamma"], p3["beta"],
        p4["w"], p4["gamma"], p4["beta"],
        p5["w"], p5["b"],
    ]

    vmem_spec = pl.BlockSpec(memory_space=pltpu.MemorySpace.VMEM)
    hbm_spec = pl.BlockSpec(memory_space=pl.ANY)
    in_specs = [vmem_spec] * len(flat)
    in_specs[9] = hbm_spec    # w4: manual DMA, overlapped with layers 1-3
    in_specs[12] = hbm_spec   # w5: manual DMA, overlapped with layers 1-4

    # Advisory cost estimate (kernel is weight-DMA / overhead bound at small B).
    mm_terms = sum(a * b for a, b in zip(DIMS[:-1], DIMS[1:]))
    flops = 2 * B * mm_terms
    weight_bytes = 2 * mm_terms                                    # bf16 weights
    small_bytes = 4 * (DIMS[1] + DIMS[5] + 2 * sum(BN_FEATURES))   # b1,b5,gamma,beta
    io_bytes = 4 * B * (LATENT_DIM + OUT_FEATURES)                 # z in, image out
    transcendentals = B * OUT_FEATURES + sum(BN_FEATURES)          # tanh + rsqrt

    out = pl.pallas_call(
        functools.partial(_generator_fused_kernel, eps=BN_EPS, slope=LRELU_SLOPE),
        out_shape=jax.ShapeDtypeStruct((B, OUT_FEATURES), jnp.float32),
        in_specs=in_specs,
        out_specs=vmem_spec,
        scratch_shapes=[
            pltpu.VMEM((DIMS[3], DIMS[4]), jnp.bfloat16),   # w4 buffer (512, 1024)
            pltpu.VMEM((DIMS[4], DIMS[5]), jnp.bfloat16),   # w5 buffer (1024, 256)
            pltpu.SemaphoreType.DMA((2,)),
        ],
        compiler_params=pltpu.CompilerParams(
            vmem_limit_bytes=32 * 1024 * 1024,   # ~2 MiB actually used; v7x-safe
        ),
        cost_estimate=pl.CostEstimate(
            flops=flops,
            transcendentals=transcendentals,
            bytes_accessed=weight_bytes + small_bytes + io_bytes,
        ),
    )(*flat)

    # view(B, C, H, W) — kept OUTSIDE the kernel so the kernel writes a
    # lane-dense (B, 256) slab instead of a masked 16-wide last dim.
    return out.reshape(B, *IMAGE_SHAPE)


generator_forward_jit = jax.jit(generator_forward)


# ------------------------ pure-JAX reference (same numerics) ----------------

def generator_reference(z, params):
    """Reference path with the same bf16-weight / f32-accumulate numerics.

    Keeps the BN-layer biases (they cancel under training BN) to validate the
    kernel's bias-dropping optimization.
    """
    def matmul(x, w):
        return jnp.dot(x.astype(w.dtype), w, preferred_element_type=jnp.float32)

    def lrelu(y):
        return jnp.maximum(y, LRELU_SLOPE * y)

    def bnorm(y, g, be):
        mean = jnp.mean(y, axis=0, keepdims=True)
        diff = y - mean
        var = jnp.mean(diff * diff, axis=0, keepdims=True)
        return diff * (jax.lax.rsqrt(var + BN_EPS) * g) + be

    p1, p2, p3, p4, p5 = params
    h = lrelu(matmul(z, p1["w"]) + p1["b"])
    h = lrelu(bnorm(matmul(h, p2["w"]) + p2["b"], p2["gamma"], p2["beta"]))
    h = lrelu(bnorm(matmul(h, p3["w"]) + p3["b"], p3["gamma"], p3["beta"]))
    h = lrelu(bnorm(matmul(h, p4["w"]) + p4["b"], p4["gamma"], p4["beta"]))
    out = jnp.tanh(matmul(h, p5["w"]) + p5["b"])
    return out.reshape(z.shape[0], *IMAGE_SHAPE)


# ------------------------------ parameter init ------------------------------

def init_params(key):
    """Deterministic init; shapes match the PyTorch module.

    Weights are stored in bf16 (memory-bound kernel -> halves weight DMA);
    biases and BatchNorm affine params stay f32.
    """
    params = []
    for i, (fin, fout) in enumerate(zip(DIMS[:-1], DIMS[1:])):
        key, kw, kb = jax.random.split(key, 3)
        bound = 1.0 / (fin ** 0.5)
        w = jax.random.uniform(kw, (fin, fout), jnp.float32, -bound, bound)
        b = jax.random.uniform(kb, (1, fout), jnp.float32, -bound, bound)
        layer = {"w": w.astype(jnp.bfloat16), "b": b}
        # BatchNorm on hidden blocks 2..4 (not first block, not output layer).
        if 1 <= i <= 3:
            layer["gamma"] = jnp.ones((1, fout), jnp.float32)
            layer["beta"] = jnp.zeros((1, fout), jnp.float32)
        params.append(layer)
    return params


# ----------------------------------- main -----------------------------------

if __name__ == "__main__":
    key = jax.random.PRNGKey(0)
    kp, kz = jax.random.split(key)
    params = init_params(kp)

    batch = 8   # small demo batch; raise to >=128/256 to fill the MXU M dim
    z = jax.random.normal(kz, (batch, LATENT_DIM), jnp.float32)

    image = generator_forward_jit(z, params)
    jax.block_until_ready(image)

    assert image.shape == (batch, *IMAGE_SHAPE), image.shape
    assert image.dtype == jnp.float32
    assert bool(jnp.all(jnp.isfinite(image)))
    assert bool(jnp.all(jnp.abs(image) <= 1.0))   # tanh output range

    # Validate against a same-numerics pure-JAX reference with a tolerance
    # (MXU vs XLA rounding only; bias-drop and gamma-fold are exact).
    ref = generator_reference(z, params)
    max_diff = float(jnp.max(jnp.abs(image - ref)))
    assert max_diff < 2e-2, f"mismatch vs reference: max |diff| = {max_diff}"

    print("KERNEL_OK")
</pallas_src>

<mosaic_0001>
module attributes {stable_mosaic.version = 11 : i64} {
  func.func @_generator_fused_kernel(%arg0: memref<8x64xf32, #tpu.memory_space<vmem>>, %arg1: memref<64x128xbf16, #tpu.memory_space<vmem>>, %arg2: memref<1x128xf32, #tpu.memory_space<vmem>>, %arg3: memref<128x256xbf16, #tpu.memory_space<vmem>>, %arg4: memref<1x256xf32, #tpu.memory_space<vmem>>, %arg5: memref<1x256xf32, #tpu.memory_space<vmem>>, %arg6: memref<256x512xbf16, #tpu.memory_space<vmem>>, %arg7: memref<1x512xf32, #tpu.memory_space<vmem>>, %arg8: memref<1x512xf32, #tpu.memory_space<vmem>>, %arg9: memref<512x1024xbf16, #tpu.memory_space<any>>, %arg10: memref<1x1024xf32, #tpu.memory_space<vmem>>, %arg11: memref<1x1024xf32, #tpu.memory_space<vmem>>, %arg12: memref<1024x256xbf16, #tpu.memory_space<any>>, %arg13: memref<1x256xf32, #tpu.memory_space<vmem>>, %arg14: memref<8x256xf32, #tpu.memory_space<vmem>>, %arg15: memref<512x1024xbf16, #tpu.memory_space<vmem>>, %arg16: memref<1024x256xbf16, #tpu.memory_space<vmem>>, %arg17: memref<2x!tpu.dma_semaphore, #tpu.memory_space<semaphore_mem>>) attributes {dimension_semantics = [], scalar_prefetch = 0 : i64, scratch_operands = 3 : i64, tpu.core_type = #tpu.core_type<tc>} {
    %c0_i32 = arith.constant 0 : i32
    %0 = tpu.memref_slice %arg17[%c0_i32] : memref<2x!tpu.dma_semaphore, #tpu.memory_space<semaphore_mem>> -> memref<1x!tpu.dma_semaphore, #tpu.memory_space<semaphore_mem>>
    %1 = tpu.memref_squeeze %0 : memref<1x!tpu.dma_semaphore, #tpu.memory_space<semaphore_mem>> -> memref<!tpu.dma_semaphore, #tpu.memory_space<semaphore_mem>>
    tpu.enqueue_dma source(%arg9 : memref<512x1024xbf16, #tpu.memory_space<any>>) target(%arg15 : memref<512x1024xbf16, #tpu.memory_space<vmem>>) target_semaphore(%1 : memref<!tpu.dma_semaphore, #tpu.memory_space<semaphore_mem>>)
    %c1_i32 = arith.constant 1 : i32
    %2 = tpu.memref_slice %arg17[%c1_i32] : memref<2x!tpu.dma_semaphore, #tpu.memory_space<semaphore_mem>> -> memref<1x!tpu.dma_semaphore, #tpu.memory_space<semaphore_mem>>
    %3 = tpu.memref_squeeze %2 : memref<1x!tpu.dma_semaphore, #tpu.memory_space<semaphore_mem>> -> memref<!tpu.dma_semaphore, #tpu.memory_space<semaphore_mem>>
    tpu.enqueue_dma source(%arg12 : memref<1024x256xbf16, #tpu.memory_space<any>>) target(%arg16 : memref<1024x256xbf16, #tpu.memory_space<vmem>>) target_semaphore(%3 : memref<!tpu.dma_semaphore, #tpu.memory_space<semaphore_mem>>)
    %c0 = arith.constant 0 : index
    %c0_0 = arith.constant 0 : index
    %4 = vector.load %arg0[%c0, %c0_0] : memref<8x64xf32, #tpu.memory_space<vmem>>, vector<8x64xf32>
    %5 = arith.truncf %4 : vector<8x64xf32> to vector<8x64xbf16>
    %c0_1 = arith.constant 0 : index
    %c0_2 = arith.constant 0 : index
    %6 = vector.load %arg1[%c0_1, %c0_2] : memref<64x128xbf16, #tpu.memory_space<vmem>>, vector<64x128xbf16>
    %cst = arith.constant dense<0.000000e+00> : vector<8x128xf32>
    %7 = tpu.matmul %5, %6, %cst {dimension_numbers = #tpu.dot_dimension_numbers<[1], [0], [0], [1], [0, 0, 1, 1], [], []>} : vector<8x64xbf16>, vector<64x128xbf16>, vector<8x128xf32> -> vector<8x128xf32>
    %c0_3 = arith.constant 0 : index
    %c0_4 = arith.constant 0 : index
    %8 = vector.load %arg2[%c0_3, %c0_4] : memref<1x128xf32, #tpu.memory_space<vmem>>, vector<1x128xf32>
    %9 = vector.broadcast %8 : vector<1x128xf32> to vector<8x128xf32>
    %10 = arith.addf %7, %9 : vector<8x128xf32>
    %cst_5 = arith.constant 2.000000e-01 : f32
    %11 = vector.broadcast %cst_5 : f32 to vector<8x128xf32>
    %12 = arith.mulf %11, %10 : vector<8x128xf32>
    %13 = arith.maximumf %10, %12 : vector<8x128xf32>
    %14 = arith.truncf %13 : vector<8x128xf32> to vector<8x128xbf16>
    %c0_6 = arith.constant 0 : index
    %c0_7 = arith.constant 0 : index
    %15 = vector.load %arg3[%c0_6, %c0_7] : memref<128x256xbf16, #tpu.memory_space<vmem>>, vector<128x256xbf16>
    %cst_8 = arith.constant dense<0.000000e+00> : vector<8x256xf32>
    %16 = tpu.matmul %14, %15, %cst_8 {dimension_numbers = #tpu.dot_dimension_numbers<[1], [0], [0], [1], [0, 0, 1, 1], [], []>} : vector<8x128xbf16>, vector<128x256xbf16>, vector<8x256xf32> -> vector<8x256xf32>
    %cst_9 = arith.constant dense<0.000000e+00> : vector<256xf32>
    %17 = vector.multi_reduction <add>, %16, %cst_9 [0] : vector<8x256xf32> to vector<256xf32>
    %18 = vector.shape_cast %17 : vector<256xf32> to vector<1x256xf32>
    %cst_10 = arith.constant 8.000000e+00 : f32
    %19 = vector.broadcast %cst_10 : f32 to vector<1x256xf32>
    %20 = arith.divf %18, %19 : vector<1x256xf32>
    %21 = vector.broadcast %20 : vector<1x256xf32> to vector<8x256xf32>
    %22 = arith.subf %16, %21 : vector<8x256xf32>
    %23 = arith.mulf %22, %22 : vector<8x256xf32>
    %cst_11 = arith.constant dense<0.000000e+00> : vector<256xf32>
    %24 = vector.multi_reduction <add>, %23, %cst_11 [0] : vector<8x256xf32> to vector<256xf32>
    %25 = vector.shape_cast %24 : vector<256xf32> to vector<1x256xf32>
    %cst_12 = arith.constant 8.000000e+00 : f32
    %26 = vector.broadcast %cst_12 : f32 to vector<1x256xf32>
    %27 = arith.divf %25, %26 : vector<1x256xf32>
    %cst_13 = arith.constant 8.000000e-01 : f32
    %28 = vector.broadcast %cst_13 : f32 to vector<1x256xf32>
    %29 = arith.addf %27, %28 : vector<1x256xf32>
    %30 = math.rsqrt %29 : vector<1x256xf32>
    %c0_14 = arith.constant 0 : index
    %c0_15 = arith.constant 0 : index
    %31 = vector.load %arg4[%c0_14, %c0_15] : memref<1x256xf32, #tpu.memory_space<vmem>>, vector<1x256xf32>
    %32 = arith.mulf %30, %31 : vector<1x256xf32>
    %33 = vector.broadcast %32 : vector<1x256xf32> to vector<8x256xf32>
    %34 = arith.mulf %22, %33 : vector<8x256xf32>
    %c0_16 = arith.constant 0 : index
    %c0_17 = arith.constant 0 : index
    %35 = vector.load %arg5[%c0_16, %c0_17] : memref<1x256xf32, #tpu.memory_space<vmem>>, vector<1x256xf32>
    %36 = vector.broadcast %35 : vector<1x256xf32> to vector<8x256xf32>
    %37 = arith.addf %34, %36 : vector<8x256xf32>
    %cst_18 = arith.constant 2.000000e-01 : f32
    %38 = vector.broadcast %cst_18 : f32 to vector<8x256xf32>
    %39 = arith.mulf %38, %37 : vector<8x256xf32>
    %40 = arith.maximumf %37, %39 : vector<8x256xf32>
    %41 = arith.truncf %40 : vector<8x256xf32> to vector<8x256xbf16>
    %c0_19 = arith.constant 0 : index
    %c0_20 = arith.constant 0 : index
    %42 = vector.load %arg6[%c0_19, %c0_20] : memref<256x512xbf16, #tpu.memory_space<vmem>>, vector<256x512xbf16>
    %cst_21 = arith.constant dense<0.000000e+00> : vector<8x512xf32>
    %43 = tpu.matmul %41, %42, %cst_21 {dimension_numbers = #tpu.dot_dimension_numbers<[1], [0], [0], [1], [0, 0, 1, 1], [], []>} : vector<8x256xbf16>, vector<256x512xbf16>, vector<8x512xf32> -> vector<8x512xf32>
    %cst_22 = arith.constant dense<0.000000e+00> : vector<512xf32>
    %44 = vector.multi_reduction <add>, %43, %cst_22 [0] : vector<8x512xf32> to vector<512xf32>
    %45 = vector.shape_cast %44 : vector<512xf32> to vector<1x512xf32>
    %cst_23 = arith.constant 8.000000e+00 : f32
    %46 = vector.broadcast %cst_23 : f32 to vector<1x512xf32>
    %47 = arith.divf %45, %46 : vector<1x512xf32>
    %48 = vector.broadcast %47 : vector<1x512xf32> to vector<8x512xf32>
    %49 = arith.subf %43, %48 : vector<8x512xf32>
    %50 = arith.mulf %49, %49 : vector<8x512xf32>
    %cst_24 = arith.constant dense<0.000000e+00> : vector<512xf32>
    %51 = vector.multi_reduction <add>, %50, %cst_24 [0] : vector<8x512xf32> to vector<512xf32>
    %52 = vector.shape_cast %51 : vector<512xf32> to vector<1x512xf32>
    %cst_25 = arith.constant 8.000000e+00 : f32
    %53 = vector.broadcast %cst_25 : f32 to vector<1x512xf32>
    %54 = arith.divf %52, %53 : vector<1x512xf32>
    %cst_26 = arith.constant 8.000000e-01 : f32
    %55 = vector.broadcast %cst_26 : f32 to vector<1x512xf32>
    %56 = arith.addf %54, %55 : vector<1x512xf32>
    %57 = math.rsqrt %56 : vector<1x512xf32>
    %c0_27 = arith.constant 0 : index
    %c0_28 = arith.constant 0 : index
    %58 = vector.load %arg7[%c0_27, %c0_28] : memref<1x512xf32, #tpu.memory_space<vmem>>, vector<1x512xf32>
    %59 = arith.mulf %57, %58 : vector<1x512xf32>
    %60 = vector.broadcast %59 : vector<1x512xf32> to vector<8x512xf32>
    %61 = arith.mulf %49, %60 : vector<8x512xf32>
    %c0_29 = arith.constant 0 : index
    %c0_30 = arith.constant 0 : index
    %62 = vector.load %arg8[%c0_29, %c0_30] : memref<1x512xf32, #tpu.memory_space<vmem>>, vector<1x512xf32>
    %63 = vector.broadcast %62 : vector<1x512xf32> to vector<8x512xf32>
    %64 = arith.addf %61, %63 : vector<8x512xf32>
    %cst_31 = arith.constant 2.000000e-01 : f32
    %65 = vector.broadcast %cst_31 : f32 to vector<8x512xf32>
    %66 = arith.mulf %65, %64 : vector<8x512xf32>
    %67 = arith.maximumf %64, %66 : vector<8x512xf32>
    %c0_i32_32 = arith.constant 0 : i32
    %68 = tpu.memref_slice %arg17[%c0_i32_32] : memref<2x!tpu.dma_semaphore, #tpu.memory_space<semaphore_mem>> -> memref<1x!tpu.dma_semaphore, #tpu.memory_space<semaphore_mem>>
    %69 = tpu.memref_squeeze %68 : memref<1x!tpu.dma_semaphore, #tpu.memory_space<semaphore_mem>> -> memref<!tpu.dma_semaphore, #tpu.memory_space<semaphore_mem>>
    tpu.wait_dma2 semaphore(%69 : memref<!tpu.dma_semaphore, #tpu.memory_space<semaphore_mem>>) src(%arg9 : memref<512x1024xbf16, #tpu.memory_space<any>>) dst(%arg15 : memref<512x1024xbf16, #tpu.memory_space<vmem>>)
    %70 = arith.truncf %67 : vector<8x512xf32> to vector<8x512xbf16>
    %c0_33 = arith.constant 0 : index
    %c0_34 = arith.constant 0 : index
    %71 = vector.load %arg15[%c0_33, %c0_34] : memref<512x1024xbf16, #tpu.memory_space<vmem>>, vector<512x1024xbf16>
    %cst_35 = arith.constant dense<0.000000e+00> : vector<8x1024xf32>
    %72 = tpu.matmul %70, %71, %cst_35 {dimension_numbers = #tpu.dot_dimension_numbers<[1], [0], [0], [1], [0, 0, 1, 1], [], []>} : vector<8x512xbf16>, vector<512x1024xbf16>, vector<8x1024xf32> -> vector<8x1024xf32>
    %cst_36 = arith.constant dense<0.000000e+00> : vector<1024xf32>
    %73 = vector.multi_reduction <add>, %72, %cst_36 [0] : vector<8x1024xf32> to vector<1024xf32>
    %74 = vector.shape_cast %73 : vector<1024xf32> to vector<1x1024xf32>
    %cst_37 = arith.constant 8.000000e+00 : f32
    %75 = vector.broadcast %cst_37 : f32 to vector<1x1024xf32>
    %76 = arith.divf %74, %75 : vector<1x1024xf32>
    %77 = vector.broadcast %76 : vector<1x1024xf32> to vector<8x1024xf32>
    %78 = arith.subf %72, %77 : vector<8x1024xf32>
    %79 = arith.mulf %78, %78 : vector<8x1024xf32>
    %cst_38 = arith.constant dense<0.000000e+00> : vector<1024xf32>
    %80 = vector.multi_reduction <add>, %79, %cst_38 [0] : vector<8x1024xf32> to vector<1024xf32>
    %81 = vector.shape_cast %80 : vector<1024xf32> to vector<1x1024xf32>
    %cst_39 = arith.constant 8.000000e+00 : f32
    %82 = vector.broadcast %cst_39 : f32 to vector<1x1024xf32>
    %83 = arith.divf %81, %82 : vector<1x1024xf32>
    %cst_40 = arith.constant 8.000000e-01 : f32
    %84 = vector.broadcast %cst_40 : f32 to vector<1x1024xf32>
    %85 = arith.addf %83, %84 : vector<1x1024xf32>
    %86 = math.rsqrt %85 : vector<1x1024xf32>
    %c0_41 = arith.constant 0 : index
    %c0_42 = arith.constant 0 : index
    %87 = vector.load %arg10[%c0_41, %c0_42] : memref<1x1024xf32, #tpu.memory_space<vmem>>, vector<1x1024xf32>
    %88 = arith.mulf %86, %87 : vector<1x1024xf32>
    %89 = vector.broadcast %88 : vector<1x1024xf32> to vector<8x1024xf32>
    %90 = arith.mulf %78, %89 : vector<8x1024xf32>
    %c0_43 = arith.constant 0 : index
    %c0_44 = arith.constant 0 : index
    %91 = vector.load %arg11[%c0_43, %c0_44] : memref<1x1024xf32, #tpu.memory_space<vmem>>, vector<1x1024xf32>
    %92 = vector.broadcast %91 : vector<1x1024xf32> to vector<8x1024xf32>
    %93 = arith.addf %90, %92 : vector<8x1024xf32>
    %cst_45 = arith.constant 2.000000e-01 : f32
    %94 = vector.broadcast %cst_45 : f32 to vector<8x1024xf32>
    %95 = arith.mulf %94, %93 : vector<8x1024xf32>
    %96 = arith.maximumf %93, %95 : vector<8x1024xf32>
    %c1_i32_46 = arith.constant 1 : i32
    %97 = tpu.memref_slice %arg17[%c1_i32_46] : memref<2x!tpu.dma_semaphore, #tpu.memory_space<semaphore_mem>> -> memref<1x!tpu.dma_semaphore, #tpu.memory_space<semaphore_mem>>
    %98 = tpu.memref_squeeze %97 : memref<1x!tpu.dma_semaphore, #tpu.memory_space<semaphore_mem>> -> memref<!tpu.dma_semaphore, #tpu.memory_space<semaphore_mem>>
    tpu.wait_dma2 semaphore(%98 : memref<!tpu.dma_semaphore, #tpu.memory_space<semaphore_mem>>) src(%arg12 : memref<1024x256xbf16, #tpu.memory_space<any>>) dst(%arg16 : memref<1024x256xbf16, #tpu.memory_space<vmem>>)
    %99 = arith.truncf %96 : vector<8x1024xf32> to vector<8x1024xbf16>
    %c0_47 = arith.constant 0 : index
    %c0_48 = arith.constant 0 : index
    %100 = vector.load %arg16[%c0_47, %c0_48] : memref<1024x256xbf16, #tpu.memory_space<vmem>>, vector<1024x256xbf16>
    %cst_49 = arith.constant dense<0.000000e+00> : vector<8x256xf32>
    %101 = tpu.matmul %99, %100, %cst_49 {dimension_numbers = #tpu.dot_dimension_numbers<[1], [0], [0], [1], [0, 0, 1, 1], [], []>} : vector<8x1024xbf16>, vector<1024x256xbf16>, vector<8x256xf32> -> vector<8x256xf32>
    %c0_50 = arith.constant 0 : index
    %c0_51 = arith.constant 0 : index
    %102 = vector.load %arg13[%c0_50, %c0_51] : memref<1x256xf32, #tpu.memory_space<vmem>>, vector<1x256xf32>
    %103 = vector.broadcast %102 : vector<1x256xf32> to vector<8x256xf32>
    %104 = arith.addf %101, %103 : vector<8x256xf32>
    %105 = math.tanh %104 : vector<8x256xf32>
    %c0_52 = arith.constant 0 : index
    %c0_53 = arith.constant 0 : index
    %106 = vector.load %arg14[%c0_52, %c0_53] : memref<8x256xf32, #tpu.memory_space<vmem>>, vector<8x256xf32>
    tpu.vector_store %arg14[%c0_52, %c0_53], %105 {strides = array<i32>} : memref<8x256xf32, #tpu.memory_space<vmem>>, vector<8x256xf32>,
    return
  }
}

</mosaic_0001>

<llo_original>
// kernel: generator_forward.1
$region0: #{generator_forward.1}
  #allocation0 [shape = 'u32[]', space=smem, size = 0x4, offset = 0x4, fixed_abs, tag = 'smem constant byte address 0x4 - core index']
  #allocation1 [shape = 'u32[144,128]{1,0:T(1,128)}', space=vmem, size = 0x12000, scoped, tag = 'internal scratch']
  #allocation2 [shape = 'bf16[512,1024]{1,0:T(16,128)(2,1)}', space=vmem, size = 0x100000, scoped, tag = 'scratch operand']
  #allocation3 [shape = 'bf16[1024,256]{1,0:T(16,128)(2,1)}', space=vmem, size = 0x80000, scoped, tag = 'scratch operand']
  #allocation4 [shape = 's32[2]{0}', space=sflag, size = 0x8, scoped, tag = 'scratch operand']
  #allocation16 [shape = 's32[]', space=sflag, size = 0x4, offset = 0, fixed_abs, tag = 'sflag constant byte address 0x0 - dummy sync flag']
  #allocation18 [shape = 's32[]', space=sflag, size = 0x4, offset = 0, fixed_abs, tag = 'sflag constant byte address 0x0 - dummy sync flag']
  %s0 = inlined_call_operand.hbm [shape: f32[8,64], index: 0, kind: input, shape index: {}]
  %s1 = inlined_call_operand.hbm [shape: bf16[64,128], index: 1, kind: input, shape index: {}]
  %s2 = inlined_call_operand.hbm [shape: f32[1,128], index: 2, kind: input, shape index: {}]
  %s3 = inlined_call_operand.hbm [shape: bf16[128,256], index: 3, kind: input, shape index: {}]
  %s4 = inlined_call_operand.vmem [shape: f32[1,256], index: 4, kind: input, shape index: {}]
  %s5 = inlined_call_operand.hbm [shape: f32[1,256], index: 5, kind: input, shape index: {}]
  %s6 = inlined_call_operand.hbm [shape: bf16[256,512], index: 6, kind: input, shape index: {}]
  %s7 = inlined_call_operand.vmem [shape: f32[1,512], index: 7, kind: input, shape index: {}]
  %s8 = inlined_call_operand.hbm [shape: f32[1,512], index: 8, kind: input, shape index: {}]
  %s9 = inlined_call_operand.hbm [shape: bf16[512,1024], index: 9, kind: input, shape index: {}]
  %s10 = inlined_call_operand.vmem [shape: f32[1,1024], index: 10, kind: input, shape index: {}]
  %s11 = inlined_call_operand.vmem [shape: f32[1,1024], index: 11, kind: input, shape index: {}]
  %s12 = inlined_call_operand.hbm [shape: bf16[1024,256], index: 12, kind: input, shape index: {}]
  %s13 = inlined_call_operand.vmem [shape: f32[1,256], index: 13, kind: input, shape index: {}]
  %s14 = inlined_call_operand.vmem [shape: f32[8,256], index: 14, kind: output, shape index: {}]
  %s15 = sld [smem:[#allocation0]]
  $region86: #{generator_forward.1} parent=0
    _
  %s17 = ssub.s32 1, %s15
  %s18 = scalar_select 0, %s17, %s15
  $region1: #{generator_forward.1} parent=0
    #allocation5 [shape = 'u8[4096]{0}', space=vmem, size = 0x1000, scoped, tag = 'input window, operand 0, single buffered']
    #allocation6 [shape = 's32[1]{0}', space=sflag, size = 0x4, scoped, tag = 'scoped memory for generator_forward.1']
    #allocation7 [shape = 'u8[16384]{0}', space=vmem, size = 0x4000, scoped, tag = 'input window, operand 1, single buffered']
    #allocation8 [shape = 's32[1]{0}', space=sflag, size = 0x4, scoped, tag = 'scoped memory for generator_forward.1']
    #allocation9 [shape = 'u8[512]{0}', space=vmem, size = 0x400, scoped, tag = 'input window, operand 2, single buffered']
    #allocation10 [shape = 'u8[65536]{0}', space=vmem, size = 0x10000, scoped, tag = 'input window, operand 3, single buffered']
    #allocation11 [shape = 's32[1]{0}', space=sflag, size = 0x4, scoped, tag = 'scoped memory for generator_forward.1']
    #allocation12 [shape = 'u8[1024]{0}', space=vmem, size = 0x400, scoped, tag = 'input window, operand 5, single buffered']
    #allocation13 [shape = 'u8[262144]{0}', space=vmem, size = 0x40000, scoped, tag = 'input window, operand 6, single buffered']
    #allocation14 [shape = 's32[1]{0}', space=sflag, size = 0x4, scoped, tag = 'scoped memory for generator_forward.1']
    #allocation15 [shape = 'u8[2048]{0}', space=vmem, size = 0x800, scoped, tag = 'input window, operand 8, single buffered']
    #allocation17 [shape = 'u32[9]{0}', space=smem, size = 0x24, scoped, tag = 'DMA stride descriptor']
    #allocation19 [shape = 'u32[9]{0}', space=smem, size = 0x24, scoped, tag = 'DMA stride descriptor']
    %19 = vsyncpa [#allocation6], 0
    %20 = vsyncpa [#allocation8], 0
    %21 = vsyncpa [#allocation11], 0
    %22 = vsyncpa [#allocation14], 0
    // Predicated region
    $region2: #{generator_forward.1} parent=1 // pred_check
      _
    $region3: #{generator_forward.1} parent=1 // pred_check_branch
      %24 = sbr.rel (0) target = $region5
    $region4: #{generator_forward.1} parent=1 // pred_region
      %s26 = ssub.s32 128, 128
      %27 = vsyncadd [#allocation6], %s26
      %s29 = sshll.u32 [#allocation5], 4
      %s30 = int_to_ptr.vmem [resolvable:$true] %s29
      %32 = dma.hbm_to_vmem [thread:$0]  %s0, 128, %s30, [#allocation6]
    $region5: #{generator_forward.1} parent=1 // pred_fallthru
      _
    // Predicated region
    $region6: #{generator_forward.1} parent=1 // pred_check
      _
    $region7: #{generator_forward.1} parent=1 // pred_check_branch
      %34 = sbr.rel (0) target = $region9
    $region8: #{generator_forward.1} parent=1 // pred_region
      %s36 = ssub.s32 512, 512
      %37 = vsyncadd [#allocation8], %s36
      %s38 = sshll.u32 [#allocation7], 4
      %s39 = int_to_ptr.vmem [resolvable:$true] %s38
      %44 = dma.hbm_to_vmem [thread:$0]  %s1, 512, %s39, [#allocation8], 64, 64, 4
    $region9: #{generator_forward.1} parent=1 // pred_fallthru
      _
    // Predicated region
    $region10: #{generator_forward.1} parent=1 // pred_check
      _
    $region11: #{generator_forward.1} parent=1 // pred_check_branch
      %46 = sbr.rel (0) target = $region13
    $region12: #{generator_forward.1} parent=1 // pred_region
      %s48 = ssub.s32 16, 16
      %49 = vsyncadd [#allocation8], %s48
      %s51 = sshll.u32 [#allocation9], 4
      %s52 = int_to_ptr.vmem [resolvable:$true] %s51
      %54 = dma.hbm_to_vmem [thread:$0]  %s2, 16, %s52, [#allocation8]
    $region13: #{generator_forward.1} parent=1 // pred_fallthru
      _
    // Predicated region
    $region14: #{generator_forward.1} parent=1 // pred_check
      _
    $region15: #{generator_forward.1} parent=1 // pred_check_branch
      %56 = sbr.rel (0) target = $region17
    $region16: #{generator_forward.1} parent=1 // pred_region
      %s58 = ssub.s32 2048, 2048
      %59 = vsyncadd [#allocation11], %s58
      %s60 = sshll.u32 [#allocation10], 4
      %s61 = int_to_ptr.vmem [resolvable:$true] %s60
      %66 = dma.hbm_to_vmem [thread:$0]  %s3, 2048, %s61, [#allocation11], 128, 128, 8
    $region17: #{generator_forward.1} parent=1 // pred_fallthru
      _
    // Predicated region
    $region18: #{generator_forward.1} parent=1 // pred_check
      _
    $region19: #{generator_forward.1} parent=1 // pred_check_branch
      %68 = sbr.rel (0) target = $region21
    $region20: #{generator_forward.1} parent=1 // pred_region
      _
    $region21: #{generator_forward.1} parent=1 // pred_fallthru
      _
    // Predicated region
    $region22: #{generator_forward.1} parent=1 // pred_check
      _
    $region23: #{generator_forward.1} parent=1 // pred_check_branch
      %70 = sbr.rel (0) target = $region25
    $region24: #{generator_forward.1} parent=1 // pred_region
      %s72 = ssub.s32 32, 32
      %73 = vsyncadd [#allocation11], %s72
      %s75 = sshll.u32 [#allocation12], 4
      %s76 = int_to_ptr.vmem [resolvable:$true] %s75
      %78 = dma.hbm_to_vmem [thread:$0]  %s5, 32, %s76, [#allocation11]
    $region25: #{generator_forward.1} parent=1 // pred_fallthru
      _
    // Predicated region
    $region26: #{generator_forward.1} parent=1 // pred_check
      _
    $region27: #{generator_forward.1} parent=1 // pred_check_branch
      %80 = sbr.rel (0) target = $region29
    $region28: #{generator_forward.1} parent=1 // pred_region
      %s82 = ssub.s32 8192, 8192
      %83 = vsyncadd [#allocation14], %s82
      %s84 = sshll.u32 [#allocation13], 4
      %s85 = int_to_ptr.vmem [resolvable:$true] %s84
      %90 = dma.hbm_to_vmem [thread:$0]  %s6, 8192, %s85, [#allocation14], 256, 256, 16
    $region29: #{generator_forward.1} parent=1 // pred_fallthru
      _
    // Predicated region
    $region30: #{generator_forward.1} parent=1 // pred_check
      _
    $region31: #{generator_forward.1} parent=1 // pred_check_branch
      %92 = sbr.rel (0) target = $region33
    $region32: #{generator_forward.1} parent=1 // pred_region
      _
    $region33: #{generator_forward.1} parent=1 // pred_fallthru
      _
    // Predicated region
    $region34: #{generator_forward.1} parent=1 // pred_check
      _
    $region35: #{generator_forward.1} parent=1 // pred_check_branch
      %94 = sbr.rel (0) target = $region37
    $region36: #{generator_forward.1} parent=1 // pred_region
      %s96 = ssub.s32 64, 64
      %97 = vsyncadd [#allocation14], %s96
      %s99 = sshll.u32 [#allocation15], 4
      %s100 = int_to_ptr.vmem [resolvable:$true] %s99
      %102 = dma.hbm_to_vmem [thread:$0]  %s8, 64, %s100, [#allocation14]
    $region37: #{generator_forward.1} parent=1 // pred_fallthru
      _
    // Predicated region
    $region38: #{generator_forward.1} parent=1 // pred_check
      _
    $region39: #{generator_forward.1} parent=1 // pred_check_branch
      %104 = sbr.rel (0) target = $region41
    $region40: #{generator_forward.1} parent=1 // pred_region
      _
    $region41: #{generator_forward.1} parent=1 // pred_fallthru
      _
    // Predicated region
    $region42: #{generator_forward.1} parent=1 // pred_check
      _
    $region43: #{generator_forward.1} parent=1 // pred_check_branch
      %106 = sbr.rel (0) target = $region45
    $region44: #{generator_forward.1} parent=1 // pred_region
      _
    $region45: #{generator_forward.1} parent=1 // pred_fallthru
      _
    // Predicated region
    $region46: #{generator_forward.1} parent=1 // pred_check
      _
    $region47: #{generator_forward.1} parent=1 // pred_check_branch
      %108 = sbr.rel (0) target = $region49
    $region48: #{generator_forward.1} parent=1 // pred_region
      _
    $region49: #{generator_forward.1} parent=1 // pred_fallthru
      _
    // Predicated region
    $region50: #{generator_forward.1} parent=1 // pred_check
      _
    $region51: #{generator_forward.1} parent=1 // pred_check_branch
      %110 = sbr.rel (0) target = $region53
    $region52: #{generator_forward.1} parent=1 // pred_region
      %111 = dma.done [#allocation6], 128
    $region53: #{generator_forward.1} parent=1 // pred_fallthru
      _
    // Predicated region
    $region54: #{generator_forward.1} parent=1 // pred_check
      _
    $region55: #{generator_forward.1} parent=1 // pred_check_branch
      %113 = sbr.rel (0) target = $region57
    $region56: #{generator_forward.1} parent=1 // pred_region
      %114 = dma.done [#allocation8], 512
    $region57: #{generator_forward.1} parent=1 // pred_fallthru
      _
    // Predicated region
    $region58: #{generator_forward.1} parent=1 // pred_check
      _
    $region59: #{generator_forward.1} parent=1 // pred_check_branch
      %116 = sbr.rel (0) target = $region61
    $region60: #{generator_forward.1} parent=1 // pred_region
      %117 = dma.done [#allocation8], 16
    $region61: #{generator_forward.1} parent=1 // pred_fallthru
      _
    // Predicated region
    $region62: #{generator_forward.1} parent=1 // pred_check
      _
    $region63: #{generator_forward.1} parent=1 // pred_check_branch
      %119 = sbr.rel (0) target = $region65
    $region64: #{generator_forward.1} parent=1 // pred_region
      %120 = dma.done [#allocation11], 2048
    $region65: #{generator_forward.1} parent=1 // pred_fallthru
      _
    // Predicated region
    $region66: #{generator_forward.1} parent=1 // pred_check
      _
    $region67: #{generator_forward.1} parent=1 // pred_check_branch
      %122 = sbr.rel (0) target = $region69
    $region68: #{generator_forward.1} parent=1 // pred_region
      %123 = dma.done [#allocation11], 32
    $region69: #{generator_forward.1} parent=1 // pred_fallthru
      _
    // Predicated region
    $region70: #{generator_forward.1} parent=1 // pred_check
      _
    $region71: #{generator_forward.1} parent=1 // pred_check_branch
      %125 = sbr.rel (0) target = $region73
    $region72: #{generator_forward.1} parent=1 // pred_region
      %126 = dma.done [#allocation14], 8192
    $region73: #{generator_forward.1} parent=1 // pred_fallthru
      _
    // Predicated region
    $region74: #{generator_forward.1} parent=1 // pred_check
      _
    $region75: #{generator_forward.1} parent=1 // pred_check_branch
      %128 = sbr.rel (0) target = $region77
    $region76: #{generator_forward.1} parent=1 // pred_region
      %129 = dma.done [#allocation14], 64
    $region77: #{generator_forward.1} parent=1 // pred_fallthru
      _
    %s132 = sshll.u32 1, 14
    %s133 = sxor.u32 4294967295, %s132
    %s135 = sld [smem:[#allocation0]]
    %s136 = sadd.s32 2, %s135
    %s138 = sshll.u32 7, 26
    %s139 = sxor.u32 4294967295, %s138
    %s140 = sand.u32 0, %s139
    %s141 = sshll.u32 %s136, 26
    %s142 = sor.u32 %s140, %s141
    %s143 = sshll.u32 [#allocation2], 4
    %s144 = int_to_ptr.vmem [resolvable:$true] %s143
    %147 = sst [smem:[#allocation17]] 1024
    %s148 = scalar_lea.smem [#allocation17], 1
    %149 = sst [smem:[%s148]] 1024
    %s150 = scalar_lea.smem [#allocation17], 2
    %151 = sst [smem:[%s150]] 8
    %s152 = scalar_lea.smem [#allocation17], 3
    %153 = sst [smem:[%s152]] 64
    %s154 = scalar_lea.smem [#allocation17], 4
    %155 = sst [smem:[%s154]] 128
    %s156 = scalar_lea.smem [#allocation17], 5
    %157 = sst [smem:[%s156]] 2
    %s158 = scalar_lea.smem [#allocation17], 6
    %159 = sst [smem:[%s158]] 512
    %s160 = scalar_lea.smem [#allocation17], 7
    %161 = sst [smem:[%s160]] 64
    %s162 = scalar_lea.smem [#allocation17], 8
    %163 = sst [smem:[%s162]] 4
    %165 = dma.general %s9, 32768, %s144, [#allocation4], [#allocation16], [#allocation17], %s142, 0
    %s166 = scalar_lea.sflag [#allocation4], 1
    %s168 = sshll.u32 1, 14
    %s169 = sxor.u32 4294967295, %s168
    %s171 = sadd.s32 2, %s135
    %s173 = sshll.u32 7, 26
    %s174 = sxor.u32 4294967295, %s173
    %s175 = sand.u32 0, %s174
    %s176 = sshll.u32 %s171, 26
    %s177 = sor.u32 %s175, %s176
    %s178 = sshll.u32 [#allocation3], 4
    %s179 = int_to_ptr.vmem [resolvable:$true] %s178
    %182 = sst [smem:[#allocation19]] 256
    %s183 = scalar_lea.smem [#allocation19], 1
    %184 = sst [smem:[%s183]] 256
    %s185 = scalar_lea.smem [#allocation19], 2
    %186 = sst [smem:[%s185]] 2
    %s187 = scalar_lea.smem [#allocation19], 3
    %188 = sst [smem:[%s187]] 64
    %s189 = scalar_lea.smem [#allocation19], 4
    %190 = sst [smem:[%s189]] 128
    %s191 = scalar_lea.smem [#allocation19], 5
    %192 = sst [smem:[%s191]] 2
    %s193 = scalar_lea.smem [#allocation19], 6
    %194 = sst [smem:[%s193]] 128
    %s195 = scalar_lea.smem [#allocation19], 7
    %196 = sst [smem:[%s195]] 64
    %s197 = scalar_lea.smem [#allocation19], 8
    %198 = sst [smem:[%s197]] 4
    %200 = dma.general %s12, 16384, %s179, %s166, [#allocation18], [#allocation19], %s177, 0
    %v201 = vld [vmem:[#allocation5] sm:$0xff]
    %v202 = vpack.c.bf16 %v201, %v201
    %v203 = vld [vmem:[#allocation7] sm:$0xf]
    %v204 = vld [vmem:[#allocation7 + $0x4] sm:$0xf]
    %v205 = vld [vmem:[#allocation7 + $0x8] sm:$0xf]
    %v206 = vld [vmem:[#allocation7 + $0xc] sm:$0xf]
    %v207 = vld [vmem:[#allocation7 + $0x10] sm:$0xf]
    %v208 = vld [vmem:[#allocation7 + $0x14] sm:$0xf]
    %v209 = vld [vmem:[#allocation7 + $0x18] sm:$0xf]
    %v210 = vld [vmem:[#allocation7 + $0x1c] sm:$0xf]
    %v211 = vld [vmem:[#allocation9] sm:$0x1]
    %v213 = vlaneseq
    %v214 = vshrl.u32 %v213, 7
    %v215 = vsub.s32 0, %v214
    %v216 = vrot.slane %v211, %v215
    %v226 = vunpack.c.l.b16 %v203
    %v227 = vunpack.c.l.b16 %v204
    %v228 = vunpack.c.l.b16 %v205
    %v229 = vunpack.c.l.b16 %v206
    %v230 = vunpack.c.l.b16 %v207
    %v231 = vunpack.c.l.b16 %v208
    %v232 = vunpack.c.l.b16 %v209
    %v233 = vunpack.c.l.b16 %v210
    %v234 = vpack.c.b16 %v227, %v226
    %v235 = vpack.c.b16 %v229, %v228
    %v236 = vpack.c.b16 %v231, %v230
    %v237 = vpack.c.b16 %v233, %v232
    %vm242 = vcmask 523264
    %v244 = vsel %vm242, %v202, 0
    %246 = vmatprep.subr.bf16.mxu0 0
    %247 = vmatpush1.bf16.msra.mxu0 %v234
    %248 = vmatprep.subr.bf16.mxu0 0
    %249 = vmatpush1.bf16.msra.mxu0 %v235
    %250 = vmatprep.subr.bf16.mxu0 0
    %251 = vmatpush1.bf16.msra.mxu0 %v236
    %252 = vmatprep.subr.bf16.mxu0 0
    %253 = vmatpush1.bf16.msra.mxu0 %v237
    %254 = vmatprep.subr.bf16.mxu0 0
    %255 = vmatpush1.bf16.msra.mxu0 0
    %256 = vmatprep.subr.bf16.mxu0 0
    %257 = vmatpush1.bf16.msra.mxu0 0
    %258 = vmatprep.subr.bf16.mxu0 0
    %259 = vmatpush1.bf16.msra.mxu0 0
    %260 = vmatprep.subr.bf16.mxu0 0
    %261 = vmatpush1.bf16.msra.mxu0 0
    %262 = vmatprep.subr.bf16.mxu0 0
    %263 = vmatpush1.bf16.msra.mxu0 0
    %264 = vmatprep.subr.bf16.mxu0 0
    %265 = vmatpush1.bf16.msra.mxu0 0
    %266 = vmatprep.subr.bf16.mxu0 0
    %267 = vmatpush1.bf16.msra.mxu0 0
    %268 = vmatprep.subr.bf16.mxu0 0
    %269 = vmatpush1.bf16.msra.mxu0 0
    %270 = vmatprep.subr.bf16.mxu0 0
    %271 = vmatpush1.bf16.msra.mxu0 0
    %272 = vmatprep.subr.bf16.mxu0 0
    %273 = vmatpush1.bf16.msra.mxu0 0
    %274 = vmatprep.subr.bf16.mxu0 0
    %275 = vmatpush1.bf16.msra.mxu0 0
    %276 = vmatprep.subr.bf16.mxu0 0
    %277 = vmatpush1.bf16.msra.mxu0 0
    %278 = vmatprep.mubr.bf16.mxu0 0
    %279 = vmatmul.mubr.bf16.gmra.mrb[0].mxu0 %v244
    %v280 = vpop.f32.mrb[0].mxu0
    %v281 = vadd.f32 %v216, %v280
    %v282 = vpop.f32.mrb[0].mxu0
    %v283 = vpop.f32.mrb[0].mxu0
    %v284 = vpop.f32.mrb[0].mxu0
    %285 = vdwg.mxu0
    %v286 = vmul.f32 %v281, 0.2
    %v287 = vmax.f32 %v281, %v286
    %v288 = vpack.c.bf16 %v287, %v287
    %v289 = vld [vmem:[#allocation10] sm:$0xff]
    %v290 = vld [vmem:[#allocation10 + $0x8] sm:$0xff]
    %v291 = vld [vmem:[#allocation10 + $0x10] sm:$0xff]
    %v292 = vld [vmem:[#allocation10 + $0x18] sm:$0xff]
    %v293 = vld [vmem:[#allocation10 + $0x20] sm:$0xff]
    %v294 = vld [vmem:[#allocation10 + $0x28] sm:$0xff]
    %v295 = vld [vmem:[#allocation10 + $0x30] sm:$0xff]
    %v296 = vld [vmem:[#allocation10 + $0x38] sm:$0xff]
    %v297 = vld [vmem:[#allocation10 + $0x40] sm:$0xff]
    %v298 = vld [vmem:[#allocation10 + $0x48] sm:$0xff]
    %v299 = vld [vmem:[#allocation10 + $0x50] sm:$0xff]
    %v300 = vld [vmem:[#allocation10 + $0x58] sm:$0xff]
    %v301 = vld [vmem:[#allocation10 + $0x60] sm:$0xff]
    %v302 = vld [vmem:[#allocation10 + $0x68] sm:$0xff]
    %v303 = vld [vmem:[#allocation10 + $0x70] sm:$0xff]
    %v304 = vld [vmem:[#allocation10 + $0x78] sm:$0xff]
    %v321 = vunpack.c.l.b16 %v289
    %v322 = vunpack.c.h.b16 %v289
    %v323 = vunpack.c.l.b16 %v290
    %v324 = vunpack.c.h.b16 %v290
    %v325 = vunpack.c.l.b16 %v291
    %v326 = vunpack.c.h.b16 %v291
    %v327 = vunpack.c.l.b16 %v292
    %v328 = vunpack.c.h.b16 %v292
    %v329 = vunpack.c.l.b16 %v293
    %v330 = vunpack.c.h.b16 %v293
    %v331 = vunpack.c.l.b16 %v294
    %v332 = vunpack.c.h.b16 %v294
    %v333 = vunpack.c.l.b16 %v295
    %v334 = vunpack.c.h.b16 %v295
    %v335 = vunpack.c.l.b16 %v296
    %v336 = vunpack.c.h.b16 %v296
    %v337 = vunpack.c.l.b16 %v297
    %v338 = vunpack.c.h.b16 %v297
    %v339 = vunpack.c.l.b16 %v298
    %v340 = vunpack.c.h.b16 %v298
    %v341 = vunpack.c.l.b16 %v299
    %v342 = vunpack.c.h.b16 %v299
    %v343 = vunpack.c.l.b16 %v300
    %v344 = vunpack.c.h.b16 %v300
    %v345 = vunpack.c.l.b16 %v301
    %v346 = vunpack.c.h.b16 %v301
    %v347 = vunpack.c.l.b16 %v302
    %v348 = vunpack.c.h.b16 %v302
    %v349 = vunpack.c.l.b16 %v303
    %v350 = vunpack.c.h.b16 %v303
    %v351 = vunpack.c.l.b16 %v304
    %v352 = vunpack.c.h.b16 %v304
    %v353 = vpack.c.b16 %v323, %v321
    %v354 = vpack.c.b16 %v324, %v322
    %v355 = vpack.c.b16 %v327, %v325
    %v356 = vpack.c.b16 %v328, %v326
    %v357 = vpack.c.b16 %v331, %v329
    %v358 = vpack.c.b16 %v332, %v330
    %v359 = vpack.c.b16 %v335, %v333
    %v360 = vpack.c.b16 %v336, %v334
    %v361 = vpack.c.b16 %v339, %v337
    %v362 = vpack.c.b16 %v340, %v338
    %v363 = vpack.c.b16 %v343, %v341
    %v364 = vpack.c.b16 %v344, %v342
    %v365 = vpack.c.b16 %v347, %v345
    %v366 = vpack.c.b16 %v348, %v346
    %v367 = vpack.c.b16 %v351, %v349
    %v368 = vpack.c.b16 %v352, %v350
    %385 = vmatprep.subr.bf16.mxu0 %v354
    %386 = vmatpush1.bf16.msra.mxu0 %v353
    %387 = vmatprep.subr.bf16.mxu0 %v356
    %388 = vmatpush1.bf16.msra.mxu0 %v355
    %389 = vmatprep.subr.bf16.mxu0 %v358
    %390 = vmatpush1.bf16.msra.mxu0 %v357
    %391 = vmatprep.subr.bf16.mxu0 %v360
    %392 = vmatpush1.bf16.msra.mxu0 %v359
    %393 = vmatprep.subr.bf16.mxu0 %v362
    %394 = vmatpush1.bf16.msra.mxu0 %v361
    %395 = vmatprep.subr.bf16.mxu0 %v364
    %396 = vmatpush1.bf16.msra.mxu0 %v363
    %397 = vmatprep.subr.bf16.mxu0 %v366
    %398 = vmatpush1.bf16.msra.mxu0 %v365
    %399 = vmatprep.subr.bf16.mxu0 %v368
    %400 = vmatpush1.bf16.msra.mxu0 %v367
    %401 = vmatprep.subr.bf16.mxu0 0
    %402 = vmatpush1.bf16.msra.mxu0 0
    %403 = vmatprep.subr.bf16.mxu0 0
    %404 = vmatpush1.bf16.msra.mxu0 0
    %405 = vmatprep.subr.bf16.mxu0 0
    %406 = vmatpush1.bf16.msra.mxu0 0
    %407 = vmatprep.subr.bf16.mxu0 0
    %408 = vmatpush1.bf16.msra.mxu0 0
    %409 = vmatprep.subr.bf16.mxu0 0
    %410 = vmatpush1.bf16.msra.mxu0 0
    %411 = vmatprep.subr.bf16.mxu0 0
    %412 = vmatpush1.bf16.msra.mxu0 0
    %413 = vmatprep.subr.bf16.mxu0 0
    %414 = vmatpush1.bf16.msra.mxu0 0
    %415 = vmatprep.subr.bf16.mxu0 0
    %416 = vmatpush1.bf16.msra.mxu0 0
    %417 = vmatprep.mubr.bf16.mxu0 0
    %418 = vmatmul.mubr.bf16.gmra.mrb[0].mxu0 %v288
    %v419 = vpop.f32.mrb[0].mxu0
    %v420 = vadd.f32 0.0, %v419
    %v421 = vpop.f32.mrb[0].mxu0
    %v422 = vadd.f32 0.0, %v421
    %v423 = vpop.f32.mrb[0].mxu0
    %v424 = vpop.f32.mrb[0].mxu0
    %425 = vdwg.mxu0
    %v426 = vrot.slane %v420, 4
    %v427 = vadd.f32 %v420, %v426
    %v428 = vrot.slane %v427, 2
    %v429 = vadd.f32 %v427, %v428
    %v430 = vrot.slane %v429, 1
    %v431 = vadd.f32 %v429, %v430
    %v432 = vrot.slane %v422, 4
    %v433 = vadd.f32 %v422, %v432
    %v434 = vrot.slane %v433, 2
    %v435 = vadd.f32 %v433, %v434
    %v436 = vrot.slane %v435, 1
    %v437 = vadd.f32 %v435, %v436
    %v438 = vrcp.pop 8.0
    %v439 = vmul.f32 %v431, %v438
    %v440 = vmul.f32 %v437, %v438
    %v441 = vsub.f32 %v420, %v439
    %v442 = vsub.f32 %v422, %v440
    %v443 = vmul.f32 %v441, %v441
    %v444 = vmul.f32 %v442, %v442
    %v445 = vrot.slane %v443, 4
    %v446 = vadd.f32 %v443, %v445
    %v447 = vrot.slane %v446, 2
    %v448 = vadd.f32 %v446, %v447
    %v449 = vrot.slane %v448, 1
    %v450 = vadd.f32 %v448, %v449
    %v451 = vrot.slane %v444, 4
    %v452 = vadd.f32 %v444, %v451
    %v453 = vrot.slane %v452, 2
    %v454 = vadd.f32 %v452, %v453
    %v455 = vrot.slane %v454, 1
    %v456 = vadd.f32 %v454, %v455
    %v457 = vmul.f32 %v450, %v438
    %v458 = vmul.f32 %v456, %v438
    %v459 = vadd.f32 %v457, 0.8
    %v460 = vadd.f32 %v458, 0.8
    %v461 = vrsqrt.pop %v459
    %v462 = vrsqrt.pop %v460
    %v463 = vld [vmem:[%s4] sm:$0x3]
    %v465 = vlaneseq
    %v466 = vshrl.u32 %v465, 7
    %v467 = vsub.s32 0, %v466
    %v468 = vrot.slane %v463, %v467
    %v469 = vlaneseq
    %v470 = vshrl.u32 %v469, 7
    %v471 = vsub.s32 1, %v470
    %v472 = vrot.slane %v463, %v471
    %v475 = vmul.f32 %v461, %v468
    %v476 = vmul.f32 %v462, %v472
    %v477 = vlaneseq
    %v478 = vshrl.u32 %v477, 7
    %v479 = vsub.s32 0, %v478
    %v480 = vrot.slane %v475, %v479
    %v481 = vlaneseq
    %v482 = vshrl.u32 %v481, 7
    %v483 = vsub.s32 0, %v482
    %v484 = vrot.slane %v476, %v483
    %v485 = vmul.f32 %v441, %v480
    %v486 = vmul.f32 %v442, %v484
    %v487 = vld [vmem:[#allocation12] sm:$0x3]
    %v489 = vlaneseq
    %v490 = vshrl.u32 %v489, 7
    %v491 = vsub.s32 0, %v490
    %v492 = vrot.slane %v487, %v491
    %v493 = vlaneseq
    %v494 = vshrl.u32 %v493, 7
    %v495 = vsub.s32 1, %v494
    %v496 = vrot.slane %v487, %v495
    %v499 = vadd.f32 %v485, %v492
    %v500 = vadd.f32 %v486, %v496
    %v501 = vmul.f32 %v499, 0.2
    %v502 = vmul.f32 %v500, 0.2
    %v503 = vmax.f32 %v499, %v501
    %v504 = vmax.f32 %v500, %v502
    %v505 = vpack.c.bf16 %v503, %v503
    %v506 = vpack.c.bf16 %v504, %v504
    %v507 = vld [vmem:[#allocation13] sm:$0xff]
    %v508 = vld [vmem:[#allocation13 + $0x8] sm:$0xff]
    %v509 = vld [vmem:[#allocation13 + $0x10] sm:$0xff]
    %v510 = vld [vmem:[#allocation13 + $0x18] sm:$0xff]
    %v511 = vld [vmem:[#allocation13 + $0x20] sm:$0xff]
    %v512 = vld [vmem:[#allocation13 + $0x28] sm:$0xff]
    %v513 = vld [vmem:[#allocation13 + $0x30] sm:$0xff]
    %v514 = vld [vmem:[#allocation13 + $0x38] sm:$0xff]
    %v515 = vld [vmem:[#allocation13 + $0x40] sm:$0xff]
    %v516 = vld [vmem:[#allocation13 + $0x48] sm:$0xff]
    %v517 = vld [vmem:[#allocation13 + $0x50] sm:$0xff]
    %v518 = vld [vmem:[#allocation13 + $0x58] sm:$0xff]
    %v519 = vld [vmem:[#allocation13 + $0x60] sm:$0xff]
    %v520 = vld [vmem:[#allocation13 + $0x68] sm:$0xff]
    %v521 = vld [vmem:[#allocation13 + $0x70] sm:$0xff]
    %v522 = vld [vmem:[#allocation13 + $0x78] sm:$0xff]
    %v523 = vld [vmem:[#allocation13 + $0x80] sm:$0xff]
    %v524 = vld [vmem:[#allocation13 + $0x88] sm:$0xff]
    %v525 = vld [vmem:[#allocation13 + $0x90] sm:$0xff]
    %v526 = vld [vmem:[#allocation13 + $0x98] sm:$0xff]
    %v527 = vld [vmem:[#allocation13 + $0xa0] sm:$0xff]
    %v528 = vld [vmem:[#allocation13 + $0xa8] sm:$0xff]
    %v529 = vld [vmem:[#allocation13 + $0xb0] sm:$0xff]
    %v530 = vld [vmem:[#allocation13 + $0xb8] sm:$0xff]
    %v531 = vld [vmem:[#allocation13 + $0xc0] sm:$0xff]
    %v532 = vld [vmem:[#allocation13 + $0xc8] sm:$0xff]
    %v533 = vld [vmem:[#allocation13 + $0xd0] sm:$0xff]
    %v534 = vld [vmem:[#allocation13 + $0xd8] sm:$0xff]
    %v535 = vld [vmem:[#allocation13 + $0xe0] sm:$0xff]
    %v536 = vld [vmem:[#allocation13 + $0xe8] sm:$0xff]
    %v537 = vld [vmem:[#allocation13 + $0xf0] sm:$0xff]
    %v538 = vld [vmem:[#allocation13 + $0xf8] sm:$0xff]
    %v539 = vld [vmem:[#allocation13 + $0x100] sm:$0xff]
    %v540 = vld [vmem:[#allocation13 + $0x108] sm:$0xff]
    %v541 = vld [vmem:[#allocation13 + $0x110] sm:$0xff]
    %v542 = vld [vmem:[#allocation13 + $0x118] sm:$0xff]
    %v543 = vld [vmem:[#allocation13 + $0x120] sm:$0xff]
    %v544 = vld [vmem:[#allocation13 + $0x128] sm:$0xff]
    %v545 = vld [vmem:[#allocation13 + $0x130] sm:$0xff]
    %v546 = vld [vmem:[#allocation13 + $0x138] sm:$0xff]
    %v547 = vld [vmem:[#allocation13 + $0x140] sm:$0xff]
    %v548 = vld [vmem:[#allocation13 + $0x148] sm:$0xff]
    %v549 = vld [vmem:[#allocation13 + $0x150] sm:$0xff]
    %v550 = vld [vmem:[#allocation13 + $0x158] sm:$0xff]
    %v551 = vld [vmem:[#allocation13 + $0x160] sm:$0xff]
    %v552 = vld [vmem:[#allocation13 + $0x168] sm:$0xff]
    %v553 = vld [vmem:[#allocation13 + $0x170] sm:$0xff]
    %v554 = vld [vmem:[#allocation13 + $0x178] sm:$0xff]
    %v555 = vld [vmem:[#allocation13 + $0x180] sm:$0xff]
    %v556 = vld [vmem:[#allocation13 + $0x188] sm:$0xff]
    %v557 = vld [vmem:[#allocation13 + $0x190] sm:$0xff]
    %v558 = vld [vmem:[#allocation13 + $0x198] sm:$0xff]
    %v559 = vld [vmem:[#allocation13 + $0x1a0] sm:$0xff]
    %v560 = vld [vmem:[#allocation13 + $0x1a8] sm:$0xff]
    %v561 = vld [vmem:[#allocation13 + $0x1b0] sm:$0xff]
    %v562 = vld [vmem:[#allocation13 + $0x1b8] sm:$0xff]
    %v563 = vld [vmem:[#allocation13 + $0x1c0] sm:$0xff]
    %v564 = vld [vmem:[#allocation13 + $0x1c8] sm:$0xff]
    %v565 = vld [vmem:[#allocation13 + $0x1d0] sm:$0xff]
    %v566 = vld [vmem:[#allocation13 + $0x1d8] sm:$0xff]
    %v567 = vld [vmem:[#allocation13 + $0x1e0] sm:$0xff]
    %v568 = vld [vmem:[#allocation13 + $0x1e8] sm:$0xff]
    %v569 = vld [vmem:[#allocation13 + $0x1f0] sm:$0xff]
    %v570 = vld [vmem:[#allocation13 + $0x1f8] sm:$0xff]
    %v635 = vunpack.c.l.b16 %v507
    %v636 = vunpack.c.h.b16 %v507
    %v637 = vunpack.c.l.b16 %v508
    %v638 = vunpack.c.h.b16 %v508
    %v639 = vunpack.c.l.b16 %v509
    %v640 = vunpack.c.h.b16 %v509
    %v641 = vunpack.c.l.b16 %v510
    %v642 = vunpack.c.h.b16 %v510
    %v643 = vunpack.c.l.b16 %v511
    %v644 = vunpack.c.h.b16 %v511
    %v645 = vunpack.c.l.b16 %v512
    %v646 = vunpack.c.h.b16 %v512
    %v647 = vunpack.c.l.b16 %v513
    %v648 = vunpack.c.h.b16 %v513
    %v649 = vunpack.c.l.b16 %v514
    %v650 = vunpack.c.h.b16 %v514
    %v651 = vunpack.c.l.b16 %v515
    %v652 = vunpack.c.h.b16 %v515
    %v653 = vunpack.c.l.b16 %v516
    %v654 = vunpack.c.h.b16 %v516
    %v655 = vunpack.c.l.b16 %v517
    %v656 = vunpack.c.h.b16 %v517
    %v657 = vunpack.c.l.b16 %v518
    %v658 = vunpack.c.h.b16 %v518
    %v659 = vunpack.c.l.b16 %v519
    %v660 = vunpack.c.h.b16 %v519
    %v661 = vunpack.c.l.b16 %v520
    %v662 = vunpack.c.h.b16 %v520
    %v663 = vunpack.c.l.b16 %v521
    %v664 = vunpack.c.h.b16 %v521
    %v665 = vunpack.c.l.b16 %v522
    %v666 = vunpack.c.h.b16 %v522
    %v667 = vunpack.c.l.b16 %v523
    %v668 = vunpack.c.h.b16 %v523
    %v669 = vunpack.c.l.b16 %v524
    %v670 = vunpack.c.h.b16 %v524
    %v671 = vunpack.c.l.b16 %v525
    %v672 = vunpack.c.h.b16 %v525
    %v673 = vunpack.c.l.b16 %v526
    %v674 = vunpack.c.h.b16 %v526
    %v675 = vunpack.c.l.b16 %v527
    %v676 = vunpack.c.h.b16 %v527
    %v677 = vunpack.c.l.b16 %v528
    %v678 = vunpack.c.h.b16 %v528
    %v679 = vunpack.c.l.b16 %v529
    %v680 = vunpack.c.h.b16 %v529
    %v681 = vunpack.c.l.b16 %v530
    %v682 = vunpack.c.h.b16 %v530
    %v683 = vunpack.c.l.b16 %v531
    %v684 = vunpack.c.h.b16 %v531
    %v685 = vunpack.c.l.b16 %v532
    %v686 = vunpack.c.h.b16 %v532
    %v687 = vunpack.c.l.b16 %v533
    %v688 = vunpack.c.h.b16 %v533
    %v689 = vunpack.c.l.b16 %v534
    %v690 = vunpack.c.h.b16 %v534
    %v691 = vunpack.c.l.b16 %v535
    %v692 = vunpack.c.h.b16 %v535
    %v693 = vunpack.c.l.b16 %v536
    %v694 = vunpack.c.h.b16 %v536
    %v695 = vunpack.c.l.b16 %v537
    %v696 = vunpack.c.h.b16 %v537
    %v697 = vunpack.c.l.b16 %v538
    %v698 = vunpack.c.h.b16 %v538
    %v699 = vunpack.c.l.b16 %v539
    %v700 = vunpack.c.h.b16 %v539
    %v701 = vunpack.c.l.b16 %v540
    %v702 = vunpack.c.h.b16 %v540
    %v703 = vunpack.c.l.b16 %v541
    %v704 = vunpack.c.h.b16 %v541
    %v705 = vunpack.c.l.b16 %v542
    %v706 = vunpack.c.h.b16 %v542
    %v707 = vunpack.c.l.b16 %v543
    %v708 = vunpack.c.h.b16 %v543
    %v709 = vunpack.c.l.b16 %v544
    %v710 = vunpack.c.h.b16 %v544
    %v711 = vunpack.c.l.b16 %v545
    %v712 = vunpack.c.h.b16 %v545
    %v713 = vunpack.c.l.b16 %v546
    %v714 = vunpack.c.h.b16 %v546
    %v715 = vunpack.c.l.b16 %v547
    %v716 = vunpack.c.h.b16 %v547
    %v717 = vunpack.c.l.b16 %v548
    %v718 = vunpack.c.h.b16 %v548
    %v719 = vunpack.c.l.b16 %v549
    %v720 = vunpack.c.h.b16 %v549
    %v721 = vunpack.c.l.b16 %v550
    %v722 = vunpack.c.h.b16 %v550
    %v723 = vunpack.c.l.b16 %v551
    %v724 = vunpack.c.h.b16 %v551
    %v725 = vunpack.c.l.b16 %v552
    %v726 = vunpack.c.h.b16 %v552
    %v727 = vunpack.c.l.b16 %v553
    %v728 = vunpack.c.h.b16 %v553
    %v729 = vunpack.c.l.b16 %v554
    %v730 = vunpack.c.h.b16 %v554
    %v731 = vunpack.c.l.b16 %v555
    %v732 = vunpack.c.h.b16 %v555
    %v733 = vunpack.c.l.b16 %v556
    %v734 = vunpack.c.h.b16 %v556
    %v735 = vunpack.c.l.b16 %v557
    %v736 = vunpack.c.h.b16 %v557
    %v737 = vunpack.c.l.b16 %v558
    %v738 = vunpack.c.h.b16 %v558
    %v739 = vunpack.c.l.b16 %v559
    %v740 = vunpack.c.h.b16 %v559
    %v741 = vunpack.c.l.b16 %v560
    %v742 = vunpack.c.h.b16 %v560
    %v743 = vunpack.c.l.b16 %v561
    %v744 = vunpack.c.h.b16 %v561
    %v745 = vunpack.c.l.b16 %v562
    %v746 = vunpack.c.h.b16 %v562
    %v747 = vunpack.c.l.b16 %v563
    %v748 = vunpack.c.h.b16 %v563
    %v749 = vunpack.c.l.b16 %v564
    %v750 = vunpack.c.h.b16 %v564
    %v751 = vunpack.c.l.b16 %v565
    %v752 = vunpack.c.h.b16 %v565
    %v753 = vunpack.c.l.b16 %v566
    %v754 = vunpack.c.h.b16 %v566
    %v755 = vunpack.c.l.b16 %v567
    %v756 = vunpack.c.h.b16 %v567
    %v757 = vunpack.c.l.b16 %v568
    %v758 = vunpack.c.h.b16 %v568
    %v759 = vunpack.c.l.b16 %v569
    %v760 = vunpack.c.h.b16 %v569
    %v761 = vunpack.c.l.b16 %v570
    %v762 = vunpack.c.h.b16 %v570
    %v763 = vpack.c.b16 %v639, %v635
    %v764 = vpack.c.b16 %v640, %v636
    %v765 = vpack.c.b16 %v641, %v637
    %v766 = vpack.c.b16 %v642, %v638
    %v767 = vpack.c.b16 %v647, %v643
    %v768 = vpack.c.b16 %v648, %v644
    %v769 = vpack.c.b16 %v649, %v645
    %v770 = vpack.c.b16 %v650, %v646
    %v771 = vpack.c.b16 %v655, %v651
    %v772 = vpack.c.b16 %v656, %v652
    %v773 = vpack.c.b16 %v657, %v653
    %v774 = vpack.c.b16 %v658, %v654
    %v775 = vpack.c.b16 %v663, %v659
    %v776 = vpack.c.b16 %v664, %v660
    %v777 = vpack.c.b16 %v665, %v661
    %v778 = vpack.c.b16 %v666, %v662
    %v779 = vpack.c.b16 %v671, %v667
    %v780 = vpack.c.b16 %v672, %v668
    %v781 = vpack.c.b16 %v673, %v669
    %v782 = vpack.c.b16 %v674, %v670
    %v783 = vpack.c.b16 %v679, %v675
    %v784 = vpack.c.b16 %v680, %v676
    %v785 = vpack.c.b16 %v681, %v677
    %v786 = vpack.c.b16 %v682, %v678
    %v787 = vpack.c.b16 %v687, %v683
    %v788 = vpack.c.b16 %v688, %v684
    %v789 = vpack.c.b16 %v689, %v685
    %v790 = vpack.c.b16 %v690, %v686
    %v791 = vpack.c.b16 %v695, %v691
    %v792 = vpack.c.b16 %v696, %v692
    %v793 = vpack.c.b16 %v697, %v693
    %v794 = vpack.c.b16 %v698, %v694
    %v795 = vpack.c.b16 %v703, %v699
    %v796 = vpack.c.b16 %v704, %v700
    %v797 = vpack.c.b16 %v705, %v701
    %v798 = vpack.c.b16 %v706, %v702
    %v799 = vpack.c.b16 %v711, %v707
    %v800 = vpack.c.b16 %v712, %v708
    %v801 = vpack.c.b16 %v713, %v709
    %v802 = vpack.c.b16 %v714, %v710
    %v803 = vpack.c.b16 %v719, %v715
    %v804 = vpack.c.b16 %v720, %v716
    %v805 = vpack.c.b16 %v721, %v717
    %v806 = vpack.c.b16 %v722, %v718
    %v807 = vpack.c.b16 %v727, %v723
    %v808 = vpack.c.b16 %v728, %v724
    %v809 = vpack.c.b16 %v729, %v725
    %v810 = vpack.c.b16 %v730, %v726
    %v811 = vpack.c.b16 %v735, %v731
    %v812 = vpack.c.b16 %v736, %v732
    %v813 = vpack.c.b16 %v737, %v733
    %v814 = vpack.c.b16 %v738, %v734
    %v815 = vpack.c.b16 %v743, %v739
    %v816 = vpack.c.b16 %v744, %v740
    %v817 = vpack.c.b16 %v745, %v741
    %v818 = vpack.c.b16 %v746, %v742
    %v819 = vpack.c.b16 %v751, %v747
    %v820 = vpack.c.b16 %v752, %v748
    %v821 = vpack.c.b16 %v753, %v749
    %v822 = vpack.c.b16 %v754, %v750
    %v823 = vpack.c.b16 %v759, %v755
    %v824 = vpack.c.b16 %v760, %v756
    %v825 = vpack.c.b16 %v761, %v757
    %v826 = vpack.c.b16 %v762, %v758
    %891 = vmatprep.subr.bf16.mxu0 %v764
    %892 = vmatpush1.bf16.msra.mxu0 %v763
    %893 = vmatprep.subr.bf16.mxu0 %v768
    %894 = vmatpush1.bf16.msra.mxu0 %v767
    %895 = vmatprep.subr.bf16.mxu0 %v772
    %896 = vmatpush1.bf16.msra.mxu0 %v771
    %897 = vmatprep.subr.bf16.mxu0 %v776
    %898 = vmatpush1.bf16.msra.mxu0 %v775
    %899 = vmatprep.subr.bf16.mxu0 %v780
    %900 = vmatpush1.bf16.msra.mxu0 %v779
    %901 = vmatprep.subr.bf16.mxu0 %v784
    %902 = vmatpush1.bf16.msra.mxu0 %v783
    %903 = vmatprep.subr.bf16.mxu0 %v788
    %904 = vmatpush1.bf16.msra.mxu0 %v787
    %905 = vmatprep.subr.bf16.mxu0 %v792
    %906 = vmatpush1.bf16.msra.mxu0 %v791
    %907 = vmatprep.subr.bf16.mxu0 %v796
    %908 = vmatpush1.bf16.msra.mxu0 %v795
    %909 = vmatprep.subr.bf16.mxu0 %v800
    %910 = vmatpush1.bf16.msra.mxu0 %v799
    %911 = vmatprep.subr.bf16.mxu0 %v804
    %912 = vmatpush1.bf16.msra.mxu0 %v803
    %913 = vmatprep.subr.bf16.mxu0 %v808
    %914 = vmatpush1.bf16.msra.mxu0 %v807
    %915 = vmatprep.subr.bf16.mxu0 %v812
    %916 = vmatpush1.bf16.msra.mxu0 %v811
    %917 = vmatprep.subr.bf16.mxu0 %v816
    %918 = vmatpush1.bf16.msra.mxu0 %v815
    %919 = vmatprep.subr.bf16.mxu0 %v820
    %920 = vmatpush1.bf16.msra.mxu0 %v819
    %921 = vmatprep.subr.bf16.mxu0 %v824
    %922 = vmatpush1.bf16.msra.mxu0 %v823
    %923 = vmatprep.mubr.bf16.mxu0 %v506
    %924 = vmatmul.mubr.bf16.gmra.mrb[0].mxu0 %v505
    %v925 = vpop.f32.mrb[0].mxu0
    %v926 = vadd.f32 0.0, %v925
    %v927 = vpop.f32.mrb[0].mxu0
    %v928 = vadd.f32 0.0, %v927
    %v929 = vpop.f32.mrb[0].mxu0
    %v930 = vpop.f32.mrb[0].mxu0
    %931 = vdwg.mxu0
    %932 = vmatprep.subr.bf16.mxu0 %v766
    %933 = vmatpush1.bf16.msra.mxu0 %v765
    %934 = vmatprep.subr.bf16.mxu0 %v770
    %935 = vmatpush1.bf16.msra.mxu0 %v769
    %936 = vmatprep.subr.bf16.mxu0 %v774
    %937 = vmatpush1.bf16.msra.mxu0 %v773
    %938 = vmatprep.subr.bf16.mxu0 %v778
    %939 = vmatpush1.bf16.msra.mxu0 %v777
    %940 = vmatprep.subr.bf16.mxu0 %v782
    %941 = vmatpush1.bf16.msra.mxu0 %v781
    %942 = vmatprep.subr.bf16.mxu0 %v786
    %943 = vmatpush1.bf16.msra.mxu0 %v785
    %944 = vmatprep.subr.bf16.mxu0 %v790
    %945 = vmatpush1.bf16.msra.mxu0 %v789
    %946 = vmatprep.subr.bf16.mxu0 %v794
    %947 = vmatpush1.bf16.msra.mxu0 %v793
    %948 = vmatprep.subr.bf16.mxu0 %v798
    %949 = vmatpush1.bf16.msra.mxu0 %v797
    %950 = vmatprep.subr.bf16.mxu0 %v802
    %951 = vmatpush1.bf16.msra.mxu0 %v801
    %952 = vmatprep.subr.bf16.mxu0 %v806
    %953 = vmatpush1.bf16.msra.mxu0 %v805
    %954 = vmatprep.subr.bf16.mxu0 %v810
    %955 = vmatpush1.bf16.msra.mxu0 %v809
    %956 = vmatprep.subr.bf16.mxu0 %v814
    %957 = vmatpush1.bf16.msra.mxu0 %v813
    %958 = vmatprep.subr.bf16.mxu0 %v818
    %959 = vmatpush1.bf16.msra.mxu0 %v817
    %960 = vmatprep.subr.bf16.mxu0 %v822
    %961 = vmatpush1.bf16.msra.mxu0 %v821
    %962 = vmatprep.subr.bf16.mxu0 %v826
    %963 = vmatpush1.bf16.msra.mxu0 %v825
    %964 = vmatprep.mubr.bf16.mxu0 %v506
    %965 = vmatmul.mubr.bf16.gmra.mrb[0].mxu0 %v505
    %v966 = vpop.f32.mrb[0].mxu0
    %v967 = vadd.f32 0.0, %v966
    %v968 = vpop.f32.mrb[0].mxu0
    %v969 = vadd.f32 0.0, %v968
    %v970 = vpop.f32.mrb[0].mxu0
    %v971 = vpop.f32.mrb[0].mxu0
    %972 = vdwg.mxu0
    %v973 = vrot.slane %v926, 4
    %v974 = vadd.f32 %v926, %v973
    %v975 = vrot.slane %v974, 2
    %v976 = vadd.f32 %v974, %v975
    %v977 = vrot.slane %v976, 1
    %v978 = vadd.f32 %v976, %v977
    %v979 = vrot.slane %v928, 4
    %v980 = vadd.f32 %v928, %v979
    %v981 = vrot.slane %v980, 2
    %v982 = vadd.f32 %v980, %v981
    %v983 = vrot.slane %v982, 1
    %v984 = vadd.f32 %v982, %v983
    %v985 = vrot.slane %v967, 4
    %v986 = vadd.f32 %v967, %v985
    %v987 = vrot.slane %v986, 2
    %v988 = vadd.f32 %v986, %v987
    %v989 = vrot.slane %v988, 1
    %v990 = vadd.f32 %v988, %v989
    %v991 = vrot.slane %v969, 4
    %v992 = vadd.f32 %v969, %v991
    %v993 = vrot.slane %v992, 2
    %v994 = vadd.f32 %v992, %v993
    %v995 = vrot.slane %v994, 1
    %v996 = vadd.f32 %v994, %v995
    %v997 = vmul.f32 %v978, %v438
    %v998 = vmul.f32 %v984, %v438
    %v999 = vmul.f32 %v990, %v438
    %v1000 = vmul.f32 %v996, %v438
    %v1001 = vsub.f32 %v926, %v997
    %v1002 = vsub.f32 %v928, %v998
    %v1003 = vsub.f32 %v967, %v999
    %v1004 = vsub.f32 %v969, %v1000
    %v1005 = vmul.f32 %v1001, %v1001
    %v1006 = vmul.f32 %v1002, %v1002
    %v1007 = vmul.f32 %v1003, %v1003
    %v1008 = vmul.f32 %v1004, %v1004
    %v1009 = vrot.slane %v1005, 4
    %v1010 = vadd.f32 %v1005, %v1009
    %v1011 = vrot.slane %v1010, 2
    %v1012 = vadd.f32 %v1010, %v1011
    %v1013 = vrot.slane %v1012, 1
    %v1014 = vadd.f32 %v1012, %v1013
    %v1015 = vrot.slane %v1006, 4
    %v1016 = vadd.f32 %v1006, %v1015
    %v1017 = vrot.slane %v1016, 2
    %v1018 = vadd.f32 %v1016, %v1017
    %v1019 = vrot.slane %v1018, 1
    %v1020 = vadd.f32 %v1018, %v1019
    %v1021 = vrot.slane %v1007, 4
    %v1022 = vadd.f32 %v1007, %v1021
    %v1023 = vrot.slane %v1022, 2
    %v1024 = vadd.f32 %v1022, %v1023
    %v1025 = vrot.slane %v1024, 1
    %v1026 = vadd.f32 %v1024, %v1025
    %v1027 = vrot.slane %v1008, 4
    %v1028 = vadd.f32 %v1008, %v1027
    %v1029 = vrot.slane %v1028, 2
    %v1030 = vadd.f32 %v1028, %v1029
    %v1031 = vrot.slane %v1030, 1
    %v1032 = vadd.f32 %v1030, %v1031
    %v1033 = vmul.f32 %v1014, %v438
    %v1034 = vmul.f32 %v1020, %v438
    %v1035 = vmul.f32 %v1026, %v438
    %v1036 = vmul.f32 %v1032, %v438
    %v1037 = vadd.f32 %v1033, 0.8
    %v1038 = vadd.f32 %v1034, 0.8
    %v1039 = vadd.f32 %v1035, 0.8
    %v1040 = vadd.f32 %v1036, 0.8
    %v1041 = vrsqrt.pop %v1037
    %v1042 = vrsqrt.pop %v1038
    %v1043 = vrsqrt.pop %v1039
    %v1044 = vrsqrt.pop %v1040
    %v1045 = vld [vmem:[%s7] sm:$0xf]
    %v1047 = vlaneseq
    %v1048 = vshrl.u32 %v1047, 7
    %v1049 = vsub.s32 0, %v1048
    %v1050 = vrot.slane %v1045, %v1049
    %v1051 = vlaneseq
    %v1052 = vshrl.u32 %v1051, 7
    %v1053 = vsub.s32 1, %v1052
    %v1054 = vrot.slane %v1045, %v1053
    %v1055 = vlaneseq
    %v1056 = vshrl.u32 %v1055, 7
    %v1057 = vsub.s32 2, %v1056
    %v1058 = vrot.slane %v1045, %v1057
    %v1059 = vlaneseq
    %v1060 = vshrl.u32 %v1059, 7
    %v1061 = vsub.s32 3, %v1060
    %v1062 = vrot.slane %v1045, %v1061
    %v1067 = vmul.f32 %v1041, %v1050
    %v1068 = vmul.f32 %v1042, %v1054
    %v1069 = vmul.f32 %v1043, %v1058
    %v1070 = vmul.f32 %v1044, %v1062
    %v1071 = vlaneseq
    %v1072 = vshrl.u32 %v1071, 7
    %v1073 = vsub.s32 0, %v1072
    %v1074 = vrot.slane %v1067, %v1073
    %v1075 = vlaneseq
    %v1076 = vshrl.u32 %v1075, 7
    %v1077 = vsub.s32 0, %v1076
    %v1078 = vrot.slane %v1068, %v1077
    %v1079 = vlaneseq
    %v1080 = vshrl.u32 %v1079, 7
    %v1081 = vsub.s32 0, %v1080
    %v1082 = vrot.slane %v1069, %v1081
    %v1083 = vlaneseq
    %v1084 = vshrl.u32 %v1083, 7
    %v1085 = vsub.s32 0, %v1084
    %v1086 = vrot.slane %v1070, %v1085
    %v1087 = vmul.f32 %v1001, %v1074
    %v1088 = vmul.f32 %v1002, %v1078
    %v1089 = vmul.f32 %v1003, %v1082
    %v1090 = vmul.f32 %v1004, %v1086
    %v1091 = vld [vmem:[#allocation15] sm:$0xf]
    %v1093 = vlaneseq
    %v1094 = vshrl.u32 %v1093, 7
    %v1095 = vsub.s32 0, %v1094
    %v1096 = vrot.slane %v1091, %v1095
    %v1097 = vlaneseq
    %v1098 = vshrl.u32 %v1097, 7
    %v1099 = vsub.s32 1, %v1098
    %v1100 = vrot.slane %v1091, %v1099
    %v1101 = vlaneseq
    %v1102 = vshrl.u32 %v1101, 7
    %v1103 = vsub.s32 2, %v1102
    %v1104 = vrot.slane %v1091, %v1103
    %v1105 = vlaneseq
    %v1106 = vshrl.u32 %v1105, 7
    %v1107 = vsub.s32 3, %v1106
    %v1108 = vrot.slane %v1091, %v1107
    %v1113 = vadd.f32 %v1087, %v1096
    %v1114 = vadd.f32 %v1088, %v1100
    %v1115 = vadd.f32 %v1089, %v1104
    %v1116 = vadd.f32 %v1090, %v1108
    %v1117 = vmul.f32 %v1113, 0.2
    %v1118 = vmul.f32 %v1114, 0.2
    %v1119 = vmul.f32 %v1115, 0.2
    %v1120 = vmul.f32 %v1116, 0.2
    %v1121 = vmax.f32 %v1113, %v1117
    %v1122 = vmax.f32 %v1114, %v1118
    %v1123 = vmax.f32 %v1115, %v1119
    %v1124 = vmax.f32 %v1116, %v1120
    %s1125 = smul.u32 4, 64
    %s1126 = smul.u32 %s1125, 8
    %s1127 = sshll.u32 %s1126, 4
    %1128 = dma.done [#allocation4], %s1127
    %v1129 = vpack.c.bf16 %v1121, %v1121
    %v1130 = vpack.c.bf16 %v1122, %v1122
    %v1131 = vpack.c.bf16 %v1123, %v1123
    %v1132 = vpack.c.bf16 %v1124, %v1124
    %v1133 = vld [vmem:[#allocation2] sm:$0xff]
    %v1134 = vld [vmem:[#allocation2 + $0x8] sm:$0xff]
    %v1135 = vld [vmem:[#allocation2 + $0x10] sm:$0xff]
    %v1136 = vld [vmem:[#allocation2 + $0x18] sm:$0xff]
    %v1137 = vld [vmem:[#allocation2 + $0x20] sm:$0xff]
    %v1138 = vld [vmem:[#allocation2 + $0x28] sm:$0xff]
    %v1139 = vld [vmem:[#allocation2 + $0x30] sm:$0xff]
    %v1140 = vld [vmem:[#allocation2 + $0x38] sm:$0xff]
    %v1141 = vld [vmem:[#allocation2 + $0x40] sm:$0xff]
    %v1142 = vld [vmem:[#allocation2 + $0x48] sm:$0xff]
    %v1143 = vld [vmem:[#allocation2 + $0x50] sm:$0xff]
    %v1144 = vld [vmem:[#allocation2 + $0x58] sm:$0xff]
    %v1145 = vld [vmem:[#allocation2 + $0x60] sm:$0xff]
    %v1146 = vld [vmem:[#allocation2 + $0x68] sm:$0xff]
    %v1147 = vld [vmem:[#allocation2 + $0x70] sm:$0xff]
    %v1148 = vld [vmem:[#allocation2 + $0x78] sm:$0xff]
    %v1149 = vld [vmem:[#allocation2 + $0x80] sm:$0xff]
    %v1150 = vld [vmem:[#allocation2 + $0x88] sm:$0xff]
    %v1151 = vld [vmem:[#allocation2 + $0x90] sm:$0xff]
    %v1152 = vld [vmem:[#allocation2 + $0x98] sm:$0xff]
    %v1153 = vld [vmem:[#allocation2 + $0xa0] sm:$0xff]
    %v1154 = vld [vmem:[#allocation2 + $0xa8] sm:$0xff]
    %v1155 = vld [vmem:[#allocation2 + $0xb0] sm:$0xff]
    %v1156 = vld [vmem:[#allocation2 + $0xb8] sm:$0xff]
    %v1157 = vld [vmem:[#allocation2 + $0xc0] sm:$0xff]
    %v1158 = vld [vmem:[#allocation2 + $0xc8] sm:$0xff]
    %v1159 = vld [vmem:[#allocation2 + $0xd0] sm:$0xff]
    %v1160 = vld [vmem:[#allocation2 + $0xd8] sm:$0xff]
    %v1161 = vld [vmem:[#allocation2 + $0xe0] sm:$0xff]
    %v1162 = vld [vmem:[#allocation2 + $0xe8] sm:$0xff]
    %v1163 = vld [vmem:[#allocation2 + $0xf0] sm:$0xff]
    %v1164 = vld [vmem:[#allocation2 + $0xf8] sm:$0xff]
    %v1165 = vld [vmem:[#allocation2 + $0x100] sm:$0xff]
    %v1166 = vld [vmem:[#allocation2 + $0x108] sm:$0xff]
    %v1167 = vld [vmem:[#allocation2 + $0x110] sm:$0xff]
    %v1168 = vld [vmem:[#allocation2 + $0x118] sm:$0xff]
    %v1169 = vld [vmem:[#allocation2 + $0x120] sm:$0xff]
    %v1170 = vld [vmem:[#allocation2 + $0x128] sm:$0xff]
    %v1171 = vld [vmem:[#allocation2 + $0x130] sm:$0xff]
    %v1172 = vld [vmem:[#allocation2 + $0x138] sm:$0xff]
    %v1173 = vld [vmem:[#allocation2 + $0x140] sm:$0xff]
    %v1174 = vld [vmem:[#allocation2 + $0x148] sm:$0xff]
    %v1175 = vld [vmem:[#allocation2 + $0x150] sm:$0xff]
    %v1176 = vld [vmem:[#allocation2 + $0x158] sm:$0xff]
    %v1177 = vld [vmem:[#allocation2 + $0x160] sm:$0xff]
    %v1178 = vld [vmem:[#allocation2 + $0x168] sm:$0xff]
    %v1179 = vld [vmem:[#allocation2 + $0x170] sm:$0xff]
    %v1180 = vld [vmem:[#allocation2 + $0x178] sm:$0xff]
    %v1181 = vld [vmem:[#allocation2 + $0x180] sm:$0xff]
    %v1182 = vld [vmem:[#allocation2 + $0x188] sm:$0xff]
    %v1183 = vld [vmem:[#allocation2 + $0x190] sm:$0xff]
    %v1184 = vld [vmem:[#allocation2 + $0x198] sm:$0xff]
    %v1185 = vld [vmem:[#allocation2 + $0x1a0] sm:$0xff]
    %v1186 = vld [vmem:[#allocation2 + $0x1a8] sm:$0xff]
    %v1187 = vld [vmem:[#allocation2 + $0x1b0] sm:$0xff]
    %v1188 = vld [vmem:[#allocation2 + $0x1b8] sm:$0xff]
    %v1189 = vld [vmem:[#allocation2 + $0x1c0] sm:$0xff]
    %v1190 = vld [vmem:[#allocation2 + $0x1c8] sm:$0xff]
    %v1191 = vld [vmem:[#allocation2 + $0x1d0] sm:$0xff]
    %v1192 = vld [vmem:[#allocation2 + $0x1d8] sm:$0xff]
    %v1193 = vld [vmem:[#allocation2 + $0x1e0] sm:$0xff]
    %v1194 = vld [vmem:[#allocation2 + $0x1e8] sm:$0xff]
    %v1195 = vld [vmem:[#allocation2 + $0x1f0] sm:$0xff]
    %v1196 = vld [vmem:[#allocation2 + $0x1f8] sm:$0xff]
    %v1197 = vld [vmem:[#allocation2 + $0x200] sm:$0xff]
    %v1198 = vld [vmem:[#allocation2 + $0x208] sm:$0xff]
    %v1199 = vld [vmem:[#allocation2 + $0x210] sm:$0xff]
    %v1200 = vld [vmem:[#allocation2 + $0x218] sm:$0xff]
    %v1201 = vld [vmem:[#allocation2 + $0x220] sm:$0xff]
    %v1202 = vld [vmem:[#allocation2 + $0x228] sm:$0xff]
    %v1203 = vld [vmem:[#allocation2 + $0x230] sm:$0xff]
    %v1204 = vld [vmem:[#allocation2 + $0x238] sm:$0xff]
    %v1205 = vld [vmem:[#allocation2 + $0x240] sm:$0xff]
    %v1206 = vld [vmem:[#allocation2 + $0x248] sm:$0xff]
    %v1207 = vld [vmem:[#allocation2 + $0x250] sm:$0xff]
    %v1208 = vld [vmem:[#allocation2 + $0x258] sm:$0xff]
    %v1209 = vld [vmem:[#allocation2 + $0x260] sm:$0xff]
    %v1210 = vld [vmem:[#allocation2 + $0x268] sm:$0xff]
    %v1211 = vld [vmem:[#allocation2 + $0x270] sm:$0xff]
    %v1212 = vld [vmem:[#allocation2 + $0x278] sm:$0xff]
    %v1213 = vld [vmem:[#allocation2 + $0x280] sm:$0xff]
    %v1214 = vld [vmem:[#allocation2 + $0x288] sm:$0xff]
    %v1215 = vld [vmem:[#allocation2 + $0x290] sm:$0xff]
    %v1216 = vld [vmem:[#allocation2 + $0x298] sm:$0xff]
    %v1217 = vld [vmem:[#allocation2 + $0x2a0] sm:$0xff]
    %v1218 = vld [vmem:[#allocation2 + $0x2a8] sm:$0xff]
    %v1219 = vld [vmem:[#allocation2 + $0x2b0] sm:$0xff]
    %v1220 = vld [vmem:[#allocation2 + $0x2b8] sm:$0xff]
    %v1221 = vld [vmem:[#allocation2 + $0x2c0] sm:$0xff]
    %v1222 = vld [vmem:[#allocation2 + $0x2c8] sm:$0xff]
    %v1223 = vld [vmem:[#allocation2 + $0x2d0] sm:$0xff]
    %v1224 = vld [vmem:[#allocation2 + $0x2d8] sm:$0xff]
    %v1225 = vld [vmem:[#allocation2 + $0x2e0] sm:$0xff]
    %v1226 = vld [vmem:[#allocation2 + $0x2e8] sm:$0xff]
    %v1227 = vld [vmem:[#allocation2 + $0x2f0] sm:$0xff]
    %v1228 = vld [vmem:[#allocation2 + $0x2f8] sm:$0xff]
    %v1229 = vld [vmem:[#allocation2 + $0x300] sm:$0xff]
    %v1230 = vld [vmem:[#allocation2 + $0x308] sm:$0xff]
    %v1231 = vld [vmem:[#allocation2 + $0x310] sm:$0xff]
    %v1232 = vld [vmem:[#allocation2 + $0x318] sm:$0xff]
    %v1233 = vld [vmem:[#allocation2 + $0x320] sm:$0xff]
    %v1234 = vld [vmem:[#allocation2 + $0x328] sm:$0xff]
    %v1235 = vld [vmem:[#allocation2 + $0x330] sm:$0xff]
    %v1236 = vld [vmem:[#allocation2 + $0x338] sm:$0xff]
    %v1237 = vld [vmem:[#allocation2 + $0x340] sm:$0xff]
    %v1238 = vld [vmem:[#allocation2 + $0x348] sm:$0xff]
    %v1239 = vld [vmem:[#allocation2 + $0x350] sm:$0xff]
    %v1240 = vld [vmem:[#allocation2 + $0x358] sm:$0xff]
    %v1241 = vld [vmem:[#allocation2 + $0x360] sm:$0xff]
    %v1242 = vld [vmem:[#allocation2 + $0x368] sm:$0xff]
    %v1243 = vld [vmem:[#allocation2 + $0x370] sm:$0xff]
    %v1244 = vld [vmem:[#allocation2 + $0x378] sm:$0xff]
    %v1245 = vld [vmem:[#allocation2 + $0x380] sm:$0xff]
    %v1246 = vld [vmem:[#allocation2 + $0x388] sm:$0xff]
    %v1247 = vld [vmem:[#allocation2 + $0x390] sm:$0xff]
    %v1248 = vld [vmem:[#allocation2 + $0x398] sm:$0xff]
    %v1249 = vld [vmem:[#allocation2 + $0x3a0] sm:$0xff]
    %v1250 = vld [vmem:[#allocation2 + $0x3a8] sm:$0xff]
    %v1251 = vld [vmem:[#allocation2 + $0x3b0] sm:$0xff]
    %v1252 = vld [vmem:[#allocation2 + $0x3b8] sm:$0xff]
    %v1253 = vld [vmem:[#allocation2 + $0x3c0] sm:$0xff]
    %v1254 = vld [vmem:[#allocation2 + $0x3c8] sm:$0xff]
    %v1255 = vld [vmem:[#allocation2 + $0x3d0] sm:$0xff]
    %v1256 = vld [vmem:[#allocation2 + $0x3d8] sm:$0xff]
    %v1257 = vld [vmem:[#allocation2 + $0x3e0] sm:$0xff]
    %v1258 = vld [vmem:[#allocation2 + $0x3e8] sm:$0xff]
    %v1259 = vld [vmem:[#allocation2 + $0x3f0] sm:$0xff]
    %v1260 = vld [vmem:[#allocation2 + $0x3f8] sm:$0xff]
    %v1261 = vld [vmem:[#allocation2 + $0x400] sm:$0xff]
    %v1262 = vld [vmem:[#allocation2 + $0x408] sm:$0xff]
    %v1263 = vld [vmem:[#allocation2 + $0x410] sm:$0xff]
    %v1264 = vld [vmem:[#allocation2 + $0x418] sm:$0xff]
    %v1265 = vld [vmem:[#allocation2 + $0x420] sm:$0xff]
    %v1266 = vld [vmem:[#allocation2 + $0x428] sm:$0xff]
    %v1267 = vld [vmem:[#allocation2 + $0x430] sm:$0xff]
    %v1268 = vld [vmem:[#allocation2 + $0x438] sm:$0xff]
    %v1269 = vld [vmem:[#allocation2 + $0x440] sm:$0xff]
    %v1270 = vld [vmem:[#allocation2 + $0x448] sm:$0xff]
    %v1271 = vld [vmem:[#allocation2 + $0x450] sm:$0xff]
    %v1272 = vld [vmem:[#allocation2 + $0x458] sm:$0xff]
    %v1273 = vld [vmem:[#allocation2 + $0x460] sm:$0xff]
    %v1274 = vld [vmem:[#allocation2 + $0x468] sm:$0xff]
    %v1275 = vld [vmem:[#allocation2 + $0x470] sm:$0xff]
    %v1276 = vld [vmem:[#allocation2 + $0x478] sm:$0xff]
    %v1277 = vld [vmem:[#allocation2 + $0x480] sm:$0xff]
    %v1278 = vld [vmem:[#allocation2 + $0x488] sm:$0xff]
    %v1279 = vld [vmem:[#allocation2 + $0x490] sm:$0xff]
    %v1280 = vld [vmem:[#allocation2 + $0x498] sm:$0xff]
    %v1281 = vld [vmem:[#allocation2 + $0x4a0] sm:$0xff]
    %v1282 = vld [vmem:[#allocation2 + $0x4a8] sm:$0xff]
    %v1283 = vld [vmem:[#allocation2 + $0x4b0] sm:$0xff]
    %v1284 = vld [vmem:[#allocation2 + $0x4b8] sm:$0xff]
    %v1285 = vld [vmem:[#allocation2 + $0x4c0] sm:$0xff]
    %v1286 = vld [vmem:[#allocation2 + $0x4c8] sm:$0xff]
    %v1287 = vld [vmem:[#allocation2 + $0x4d0] sm:$0xff]
    %v1288 = vld [vmem:[#allocation2 + $0x4d8] sm:$0xff]
    %v1289 = vld [vmem:[#allocation2 + $0x4e0] sm:$0xff]
    %v1290 = vld [vmem:[#allocation2 + $0x4e8] sm:$0xff]
    %v1291 = vld [vmem:[#allocation2 + $0x4f0] sm:$0xff]
    %v1292 = vld [vmem:[#allocation2 + $0x4f8] sm:$0xff]
    %v1293 = vld [vmem:[#allocation2 + $0x500] sm:$0xff]
    %v1294 = vld [vmem:[#allocation2 + $0x508] sm:$0xff]
    %v1295 = vld [vmem:[#allocation2 + $0x510] sm:$0xff]
    %v1296 = vld [vmem:[#allocation2 + $0x518] sm:$0xff]
    %v1297 = vld [vmem:[#allocation2 + $0x520] sm:$0xff]
    %v1298 = vld [vmem:[#allocation2 + $0x528] sm:$0xff]
    %v1299 = vld [vmem:[#allocation2 + $0x530] sm:$0xff]
    %v1300 = vld [vmem:[#allocation2 + $0x538] sm:$0xff]
    %v1301 = vld [vmem:[#allocation2 + $0x540] sm:$0xff]
    %v1302 = vld [vmem:[#allocation2 + $0x548] sm:$0xff]
    %v1303 = vld [vmem:[#allocation2 + $0x550] sm:$0xff]
    %v1304 = vld [vmem:[#allocation2 + $0x558] sm:$0xff]
    %v1305 = vld [vmem:[#allocation2 + $0x560] sm:$0xff]
    %v1306 = vld [vmem:[#allocation2 + $0x568] sm:$0xff]
    %v1307 = vld [vmem:[#allocation2 + $0x570] sm:$0xff]
    %v1308 = vld [vmem:[#allocation2 + $0x578] sm:$0xff]
    %v1309 = vld [vmem:[#allocation2 + $0x580] sm:$0xff]
    %v1310 = vld [vmem:[#allocation2 + $0x588] sm:$0xff]
    %v1311 = vld [vmem:[#allocation2 + $0x590] sm:$0xff]
    %v1312 = vld [vmem:[#allocation2 + $0x598] sm:$0xff]
    %v1313 = vld [vmem:[#allocation2 + $0x5a0] sm:$0xff]
    %v1314 = vld [vmem:[#allocation2 + $0x5a8] sm:$0xff]
    %v1315 = vld [vmem:[#allocation2 + $0x5b0] sm:$0xff]
    %v1316 = vld [vmem:[#allocation2 + $0x5b8] sm:$0xff]
    %v1317 = vld [vmem:[#allocation2 + $0x5c0] sm:$0xff]
    %v1318 = vld [vmem:[#allocation2 + $0x5c8] sm:$0xff]
    %v1319 = vld [vmem:[#allocation2 + $0x5d0] sm:$0xff]
    %v1320 = vld [vmem:[#allocation2 + $0x5d8] sm:$0xff]
    %v1321 = vld [vmem:[#allocation2 + $0x5e0] sm:$0xff]
    %v1322 = vld [vmem:[#allocation2 + $0x5e8] sm:$0xff]
    %v1323 = vld [vmem:[#allocation2 + $0x5f0] sm:$0xff]
    %v1324 = vld [vmem:[#allocation2 + $0x5f8] sm:$0xff]
    %v1325 = vld [vmem:[#allocation2 + $0x600] sm:$0xff]
    %v1326 = vld [vmem:[#allocation2 + $0x608] sm:$0xff]
    %v1327 = vld [vmem:[#allocation2 + $0x610] sm:$0xff]
    %v1328 = vld [vmem:[#allocation2 + $0x618] sm:$0xff]
    %v1329 = vld [vmem:[#allocation2 + $0x620] sm:$0xff]
    %v1330 = vld [vmem:[#allocation2 + $0x628] sm:$0xff]
    %v1331 = vld [vmem:[#allocation2 + $0x630] sm:$0xff]
    %v1332 = vld [vmem:[#allocation2 + $0x638] sm:$0xff]
    %v1333 = vld [vmem:[#allocation2 + $0x640] sm:$0xff]
    %v1334 = vld [vmem:[#allocation2 + $0x648] sm:$0xff]
    %v1335 = vld [vmem:[#allocation2 + $0x650] sm:$0xff]
    %v1336 = vld [vmem:[#allocation2 + $0x658] sm:$0xff]
    %v1337 = vld [vmem:[#allocation2 + $0x660] sm:$0xff]
    %v1338 = vld [vmem:[#allocation2 + $0x668] sm:$0xff]
    %v1339 = vld [vmem:[#allocation2 + $0x670] sm:$0xff]
    %v1340 = vld [vmem:[#allocation2 + $0x678] sm:$0xff]
    %v1341 = vld [vmem:[#allocation2 + $0x680] sm:$0xff]
    %v1342 = vld [vmem:[#allocation2 + $0x688] sm:$0xff]
    %v1343 = vld [vmem:[#allocation2 + $0x690] sm:$0xff]
    %v1344 = vld [vmem:[#allocation2 + $0x698] sm:$0xff]
    %v1345 = vld [vmem:[#allocation2 + $0x6a0] sm:$0xff]
    %v1346 = vld [vmem:[#allocation2 + $0x6a8] sm:$0xff]
    %v1347 = vld [vmem:[#allocation2 + $0x6b0] sm:$0xff]
    %v1348 = vld [vmem:[#allocation2 + $0x6b8] sm:$0xff]
    %v1349 = vld [vmem:[#allocation2 + $0x6c0] sm:$0xff]
    %v1350 = vld [vmem:[#allocation2 + $0x6c8] sm:$0xff]
    %v1351 = vld [vmem:[#allocation2 + $0x6d0] sm:$0xff]
    %v1352 = vld [vmem:[#allocation2 + $0x6d8] sm:$0xff]
    %v1353 = vld [vmem:[#allocation2 + $0x6e0] sm:$0xff]
    %v1354 = vld [vmem:[#allocation2 + $0x6e8] sm:$0xff]
    %v1355 = vld [vmem:[#allocation2 + $0x6f0] sm:$0xff]
    %v1356 = vld [vmem:[#allocation2 + $0x6f8] sm:$0xff]
    %v1357 = vld [vmem:[#allocation2 + $0x700] sm:$0xff]
    %v1358 = vld [vmem:[#allocation2 + $0x708] sm:$0xff]
    %v1359 = vld [vmem:[#allocation2 + $0x710] sm:$0xff]
    %v1360 = vld [vmem:[#allocation2 + $0x718] sm:$0xff]
    %v1361 = vld [vmem:[#allocation2 + $0x720] sm:$0xff]
    %v1362 = vld [vmem:[#allocation2 + $0x728] sm:$0xff]
    %v1363 = vld [vmem:[#allocation2 + $0x730] sm:$0xff]
    %v1364 = vld [vmem:[#allocation2 + $0x738] sm:$0xff]
    %v1365 = vld [vmem:[#allocation2 + $0x740] sm:$0xff]
    %v1366 = vld [vmem:[#allocation2 + $0x748] sm:$0xff]
    %v1367 = vld [vmem:[#allocation2 + $0x750] sm:$0xff]
    %v1368 = vld [vmem:[#allocation2 + $0x758] sm:$0xff]
    %v1369 = vld [vmem:[#allocation2 + $0x760] sm:$0xff]
    %v1370 = vld [vmem:[#allocation2 + $0x768] sm:$0xff]
    %v1371 = vld [vmem:[#allocation2 + $0x770] sm:$0xff]
    %v1372 = vld [vmem:[#allocation2 + $0x778] sm:$0xff]
    %v1373 = vld [vmem:[#allocation2 + $0x780] sm:$0xff]
    %v1374 = vld [vmem:[#allocation2 + $0x788] sm:$0xff]
    %v1375 = vld [vmem:[#allocation2 + $0x790] sm:$0xff]
    %v1376 = vld [vmem:[#allocation2 + $0x798] sm:$0xff]
    %v1377 = vld [vmem:[#allocation2 + $0x7a0] sm:$0xff]
    %v1378 = vld [vmem:[#allocation2 + $0x7a8] sm:$0xff]
    %v1379 = vld [vmem:[#allocation2 + $0x7b0] sm:$0xff]
    %v1380 = vld [vmem:[#allocation2 + $0x7b8] sm:$0xff]
    %v1381 = vld [vmem:[#allocation2 + $0x7c0] sm:$0xff]
    %v1382 = vld [vmem:[#allocation2 + $0x7c8] sm:$0xff]
    %v1383 = vld [vmem:[#allocation2 + $0x7d0] sm:$0xff]
    %v1384 = vld [vmem:[#allocation2 + $0x7d8] sm:$0xff]
    %v1385 = vld [vmem:[#allocation2 + $0x7e0] sm:$0xff]
    %v1386 = vld [vmem:[#allocation2 + $0x7e8] sm:$0xff]
    %v1387 = vld [vmem:[#allocation2 + $0x7f0] sm:$0xff]
    %v1388 = vld [vmem:[#allocation2 + $0x7f8] sm:$0xff]
    %1389 = vmatprep.subr.bf16.mxu0 %v1134
    %1390 = vmatpush1.bf16.msra.mxu0 %v1133
    %1391 = vmatprep.subr.bf16.mxu0 %v1142
    %1392 = vmatpush1.bf16.msra.mxu0 %v1141
    %1393 = vmatprep.subr.bf16.mxu0 %v1150
    %1394 = vmatpush1.bf16.msra.mxu0 %v1149
    %1395 = vmatprep.subr.bf16.mxu0 %v1158
    %1396 = vmatpush1.bf16.msra.mxu0 %v1157
    %1397 = vmatprep.subr.bf16.mxu0 %v1166
    %1398 = vmatpush1.bf16.msra.mxu0 %v1165
    %1399 = vmatprep.subr.bf16.mxu0 %v1174
    %1400 = vmatpush1.bf16.msra.mxu0 %v1173
    %1401 = vmatprep.subr.bf16.mxu0 %v1182
    %1402 = vmatpush1.bf16.msra.mxu0 %v1181
    %1403 = vmatprep.subr.bf16.mxu0 %v1190
    %1404 = vmatpush1.bf16.msra.mxu0 %v1189
    %1405 = vmatprep.subr.bf16.mxu0 %v1198
    %1406 = vmatpush1.bf16.msra.mxu0 %v1197
    %1407 = vmatprep.subr.bf16.mxu0 %v1206
    %1408 = vmatpush1.bf16.msra.mxu0 %v1205
    %1409 = vmatprep.subr.bf16.mxu0 %v1214
    %1410 = vmatpush1.bf16.msra.mxu0 %v1213
    %1411 = vmatprep.subr.bf16.mxu0 %v1222
    %1412 = vmatpush1.bf16.msra.mxu0 %v1221
    %1413 = vmatprep.subr.bf16.mxu0 %v1230
    %1414 = vmatpush1.bf16.msra.mxu0 %v1229
    %1415 = vmatprep.subr.bf16.mxu0 %v1238
    %1416 = vmatpush1.bf16.msra.mxu0 %v1237
    %1417 = vmatprep.subr.bf16.mxu0 %v1246
    %1418 = vmatpush1.bf16.msra.mxu0 %v1245
    %1419 = vmatprep.subr.bf16.mxu0 %v1254
    %1420 = vmatpush1.bf16.msra.mxu0 %v1253
    %1421 = vmatprep.mubr.bf16.mxu0 %v1130
    %1422 = vmatmul.mubr.bf16.gmra.mrb[0].mxu0 %v1129
    %v1423 = vpop.f32.mrb[0].mxu0
    %v1424 = vadd.f32 0.0, %v1423
    %v1425 = vpop.f32.mrb[0].mxu0
    %v1426 = vadd.f32 0.0, %v1425
    %v1427 = vpop.f32.mrb[0].mxu0
    %v1428 = vpop.f32.mrb[0].mxu0
    %1429 = vdwg.mxu0
    %1430 = vmatprep.subr.bf16.mxu0 %v1262
    %1431 = vmatpush1.bf16.msra.mxu0 %v1261
    %1432 = vmatprep.subr.bf16.mxu0 %v1270
    %1433 = vmatpush1.bf16.msra.mxu0 %v1269
    %1434 = vmatprep.subr.bf16.mxu0 %v1278
    %1435 = vmatpush1.bf16.msra.mxu0 %v1277
    %1436 = vmatprep.subr.bf16.mxu0 %v1286
    %1437 = vmatpush1.bf16.msra.mxu0 %v1285
    %1438 = vmatprep.subr.bf16.mxu0 %v1294
    %1439 = vmatpush1.bf16.msra.mxu0 %v1293
    %1440 = vmatprep.subr.bf16.mxu0 %v1302
    %1441 = vmatpush1.bf16.msra.mxu0 %v1301
    %1442 = vmatprep.subr.bf16.mxu0 %v1310
    %1443 = vmatpush1.bf16.msra.mxu0 %v1309
    %1444 = vmatprep.subr.bf16.mxu0 %v1318
    %1445 = vmatpush1.bf16.msra.mxu0 %v1317
    %1446 = vmatprep.subr.bf16.mxu0 %v1326
    %1447 = vmatpush1.bf16.msra.mxu0 %v1325
    %1448 = vmatprep.subr.bf16.mxu0 %v1334
    %1449 = vmatpush1.bf16.msra.mxu0 %v1333
    %1450 = vmatprep.subr.bf16.mxu0 %v1342
    %1451 = vmatpush1.bf16.msra.mxu0 %v1341
    %1452 = vmatprep.subr.bf16.mxu0 %v1350
    %1453 = vmatpush1.bf16.msra.mxu0 %v1349
    %1454 = vmatprep.subr.bf16.mxu0 %v1358
    %1455 = vmatpush1.bf16.msra.mxu0 %v1357
    %1456 = vmatprep.subr.bf16.mxu0 %v1366
    %1457 = vmatpush1.bf16.msra.mxu0 %v1365
    %1458 = vmatprep.subr.bf16.mxu0 %v1374
    %1459 = vmatpush1.bf16.msra.mxu0 %v1373
    %1460 = vmatprep.subr.bf16.mxu0 %v1382
    %1461 = vmatpush1.bf16.msra.mxu0 %v1381
    %1462 = vmatprep.mubr.bf16.mxu0 %v1132
    %1463 = vmatmul.mubr.bf16.gmra.mrb[0].mxu0 %v1131
    %v1464 = vpop.f32.mrb[0].mxu0
    %v1465 = vadd.f32 %v1424, %v1464
    %v1466 = vpop.f32.mrb[0].mxu0
    %v1467 = vadd.f32 %v1426, %v1466
    %v1468 = vpop.f32.mrb[0].mxu0
    %v1469 = vpop.f32.mrb[0].mxu0
    %1470 = vdwg.mxu0
    %1471 = vmatprep.subr.bf16.mxu0 %v1136
    %1472 = vmatpush1.bf16.msra.mxu0 %v1135
    %1473 = vmatprep.subr.bf16.mxu0 %v1144
    %1474 = vmatpush1.bf16.msra.mxu0 %v1143
    %1475 = vmatprep.subr.bf16.mxu0 %v1152
    %1476 = vmatpush1.bf16.msra.mxu0 %v1151
    %1477 = vmatprep.subr.bf16.mxu0 %v1160
    %1478 = vmatpush1.bf16.msra.mxu0 %v1159
    %1479 = vmatprep.subr.bf16.mxu0 %v1168
    %1480 = vmatpush1.bf16.msra.mxu0 %v1167
    %1481 = vmatprep.subr.bf16.mxu0 %v1176
    %1482 = vmatpush1.bf16.msra.mxu0 %v1175
    %1483 = vmatprep.subr.bf16.mxu0 %v1184
    %1484 = vmatpush1.bf16.msra.mxu0 %v1183
    %1485 = vmatprep.subr.bf16.mxu0 %v1192
    %1486 = vmatpush1.bf16.msra.mxu0 %v1191
    %1487 = vmatprep.subr.bf16.mxu0 %v1200
    %1488 = vmatpush1.bf16.msra.mxu0 %v1199
    %1489 = vmatprep.subr.bf16.mxu0 %v1208
    %1490 = vmatpush1.bf16.msra.mxu0 %v1207
    %1491 = vmatprep.subr.bf16.mxu0 %v1216
    %1492 = vmatpush1.bf16.msra.mxu0 %v1215
    %1493 = vmatprep.subr.bf16.mxu0 %v1224
    %1494 = vmatpush1.bf16.msra.mxu0 %v1223
    %1495 = vmatprep.subr.bf16.mxu0 %v1232
    %1496 = vmatpush1.bf16.msra.mxu0 %v1231
    %1497 = vmatprep.subr.bf16.mxu0 %v1240
    %1498 = vmatpush1.bf16.msra.mxu0 %v1239
    %1499 = vmatprep.subr.bf16.mxu0 %v1248
    %1500 = vmatpush1.bf16.msra.mxu0 %v1247
    %1501 = vmatprep.subr.bf16.mxu0 %v1256
    %1502 = vmatpush1.bf16.msra.mxu0 %v1255
    %1503 = vmatprep.mubr.bf16.mxu0 %v1130
    %1504 = vmatmul.mubr.bf16.gmra.mrb[0].mxu0 %v1129
    %v1505 = vpop.f32.mrb[0].mxu0
    %v1506 = vadd.f32 0.0, %v1505
    %v1507 = vpop.f32.mrb[0].mxu0
    %v1508 = vadd.f32 0.0, %v1507
    %v1509 = vpop.f32.mrb[0].mxu0
    %v1510 = vpop.f32.mrb[0].mxu0
    %1511 = vdwg.mxu0
    %1512 = vmatprep.subr.bf16.mxu0 %v1264
    %1513 = vmatpush1.bf16.msra.mxu0 %v1263
    %1514 = vmatprep.subr.bf16.mxu0 %v1272
    %1515 = vmatpush1.bf16.msra.mxu0 %v1271
    %1516 = vmatprep.subr.bf16.mxu0 %v1280
    %1517 = vmatpush1.bf16.msra.mxu0 %v1279
    %1518 = vmatprep.subr.bf16.mxu0 %v1288
    %1519 = vmatpush1.bf16.msra.mxu0 %v1287
    %1520 = vmatprep.subr.bf16.mxu0 %v1296
    %1521 = vmatpush1.bf16.msra.mxu0 %v1295
    %1522 = vmatprep.subr.bf16.mxu0 %v1304
    %1523 = vmatpush1.bf16.msra.mxu0 %v1303
    %1524 = vmatprep.subr.bf16.mxu0 %v1312
    %1525 = vmatpush1.bf16.msra.mxu0 %v1311
    %1526 = vmatprep.subr.bf16.mxu0 %v1320
    %1527 = vmatpush1.bf16.msra.mxu0 %v1319
    %1528 = vmatprep.subr.bf16.mxu0 %v1328
    %1529 = vmatpush1.bf16.msra.mxu0 %v1327
    %1530 = vmatprep.subr.bf16.mxu0 %v1336
    %1531 = vmatpush1.bf16.msra.mxu0 %v1335
    %1532 = vmatprep.subr.bf16.mxu0 %v1344
    %1533 = vmatpush1.bf16.msra.mxu0 %v1343
    %1534 = vmatprep.subr.bf16.mxu0 %v1352
    %1535 = vmatpush1.bf16.msra.mxu0 %v1351
    %1536 = vmatprep.subr.bf16.mxu0 %v1360
    %1537 = vmatpush1.bf16.msra.mxu0 %v1359
    %1538 = vmatprep.subr.bf16.mxu0 %v1368
    %1539 = vmatpush1.bf16.msra.mxu0 %v1367
    %1540 = vmatprep.subr.bf16.mxu0 %v1376
    %1541 = vmatpush1.bf16.msra.mxu0 %v1375
    %1542 = vmatprep.subr.bf16.mxu0 %v1384
    %1543 = vmatpush1.bf16.msra.mxu0 %v1383
    %1544 = vmatprep.mubr.bf16.mxu0 %v1132
    %1545 = vmatmul.mubr.bf16.gmra.mrb[0].mxu0 %v1131
    %v1546 = vpop.f32.mrb[0].mxu0
    %v1547 = vadd.f32 %v1506, %v1546
    %v1548 = vpop.f32.mrb[0].mxu0
    %v1549 = vadd.f32 %v1508, %v1548
    %v1550 = vpop.f32.mrb[0].mxu0
    %v1551 = vpop.f32.mrb[0].mxu0
    %1552 = vdwg.mxu0
    %1553 = vmatprep.subr.bf16.mxu0 %v1138
    %1554 = vmatpush1.bf16.msra.mxu0 %v1137
    %1555 = vmatprep.subr.bf16.mxu0 %v1146
    %1556 = vmatpush1.bf16.msra.mxu0 %v1145
    %1557 = vmatprep.subr.bf16.mxu0 %v1154
    %1558 = vmatpush1.bf16.msra.mxu0 %v1153
    %1559 = vmatprep.subr.bf16.mxu0 %v1162
    %1560 = vmatpush1.bf16.msra.mxu0 %v1161
    %1561 = vmatprep.subr.bf16.mxu0 %v1170
    %1562 = vmatpush1.bf16.msra.mxu0 %v1169
    %1563 = vmatprep.subr.bf16.mxu0 %v1178
    %1564 = vmatpush1.bf16.msra.mxu0 %v1177
    %1565 = vmatprep.subr.bf16.mxu0 %v1186
    %1566 = vmatpush1.bf16.msra.mxu0 %v1185
    %1567 = vmatprep.subr.bf16.mxu0 %v1194
    %1568 = vmatpush1.bf16.msra.mxu0 %v1193
    %1569 = vmatprep.subr.bf16.mxu0 %v1202
    %1570 = vmatpush1.bf16.msra.mxu0 %v1201
    %1571 = vmatprep.subr.bf16.mxu0 %v1210
    %1572 = vmatpush1.bf16.msra.mxu0 %v1209
    %1573 = vmatprep.subr.bf16.mxu0 %v1218
    %1574 = vmatpush1.bf16.msra.mxu0 %v1217
    %1575 = vmatprep.subr.bf16.mxu0 %v1226
    %1576 = vmatpush1.bf16.msra.mxu0 %v1225
    %1577 = vmatprep.subr.bf16.mxu0 %v1234
    %1578 = vmatpush1.bf16.msra.mxu0 %v1233
    %1579 = vmatprep.subr.bf16.mxu0 %v1242
    %1580 = vmatpush1.bf16.msra.mxu0 %v1241
    %1581 = vmatprep.subr.bf16.mxu0 %v1250
    %1582 = vmatpush1.bf16.msra.mxu0 %v1249
    %1583 = vmatprep.subr.bf16.mxu0 %v1258
    %1584 = vmatpush1.bf16.msra.mxu0 %v1257
    %1585 = vmatprep.mubr.bf16.mxu0 %v1130
    %1586 = vmatmul.mubr.bf16.gmra.mrb[0].mxu0 %v1129
    %v1587 = vpop.f32.mrb[0].mxu0
    %v1588 = vadd.f32 0.0, %v1587
    %v1589 = vpop.f32.mrb[0].mxu0
    %v1590 = vadd.f32 0.0, %v1589
    %v1591 = vpop.f32.mrb[0].mxu0
    %v1592 = vpop.f32.mrb[0].mxu0
    %1593 = vdwg.mxu0
    %1594 = vmatprep.subr.bf16.mxu0 %v1266
    %1595 = vmatpush1.bf16.msra.mxu0 %v1265
    %1596 = vmatprep.subr.bf16.mxu0 %v1274
    %1597 = vmatpush1.bf16.msra.mxu0 %v1273
    %1598 = vmatprep.subr.bf16.mxu0 %v1282
    %1599 = vmatpush1.bf16.msra.mxu0 %v1281
    %1600 = vmatprep.subr.bf16.mxu0 %v1290
    %1601 = vmatpush1.bf16.msra.mxu0 %v1289
    %1602 = vmatprep.subr.bf16.mxu0 %v1298
    %1603 = vmatpush1.bf16.msra.mxu0 %v1297
    %1604 = vmatprep.subr.bf16.mxu0 %v1306
    %1605 = vmatpush1.bf16.msra.mxu0 %v1305
    %1606 = vmatprep.subr.bf16.mxu0 %v1314
    %1607 = vmatpush1.bf16.msra.mxu0 %v1313
    %1608 = vmatprep.subr.bf16.mxu0 %v1322
    %1609 = vmatpush1.bf16.msra.mxu0 %v1321
    %1610 = vmatprep.subr.bf16.mxu0 %v1330
    %1611 = vmatpush1.bf16.msra.mxu0 %v1329
    %1612 = vmatprep.subr.bf16.mxu0 %v1338
    %1613 = vmatpush1.bf16.msra.mxu0 %v1337
    %1614 = vmatprep.subr.bf16.mxu0 %v1346
    %1615 = vmatpush1.bf16.msra.mxu0 %v1345
    %1616 = vmatprep.subr.bf16.mxu0 %v1354
    %1617 = vmatpush1.bf16.msra.mxu0 %v1353
    %1618 = vmatprep.subr.bf16.mxu0 %v1362
    %1619 = vmatpush1.bf16.msra.mxu0 %v1361
    %1620 = vmatprep.subr.bf16.mxu0 %v1370
    %1621 = vmatpush1.bf16.msra.mxu0 %v1369
    %1622 = vmatprep.subr.bf16.mxu0 %v1378
    %1623 = vmatpush1.bf16.msra.mxu0 %v1377
    %1624 = vmatprep.subr.bf16.mxu0 %v1386
    %1625 = vmatpush1.bf16.msra.mxu0 %v1385
    %1626 = vmatprep.mubr.bf16.mxu0 %v1132
    %1627 = vmatmul.mubr.bf16.gmra.mrb[0].mxu0 %v1131
    %v1628 = vpop.f32.mrb[0].mxu0
    %v1629 = vadd.f32 %v1588, %v1628
    %v1630 = vpop.f32.mrb[0].mxu0
    %v1631 = vadd.f32 %v1590, %v1630
    %v1632 = vpop.f32.mrb[0].mxu0
    %v1633 = vpop.f32.mrb[0].mxu0
    %1634 = vdwg.mxu0
    %1635 = vmatprep.subr.bf16.mxu0 %v1140
    %1636 = vmatpush1.bf16.msra.mxu0 %v1139
    %1637 = vmatprep.subr.bf16.mxu0 %v1148
    %1638 = vmatpush1.bf16.msra.mxu0 %v1147
    %1639 = vmatprep.subr.bf16.mxu0 %v1156
    %1640 = vmatpush1.bf16.msra.mxu0 %v1155
    %1641 = vmatprep.subr.bf16.mxu0 %v1164
    %1642 = vmatpush1.bf16.msra.mxu0 %v1163
    %1643 = vmatprep.subr.bf16.mxu0 %v1172
    %1644 = vmatpush1.bf16.msra.mxu0 %v1171
    %1645 = vmatprep.subr.bf16.mxu0 %v1180
    %1646 = vmatpush1.bf16.msra.mxu0 %v1179
    %1647 = vmatprep.subr.bf16.mxu0 %v1188
    %1648 = vmatpush1.bf16.msra.mxu0 %v1187
    %1649 = vmatprep.subr.bf16.mxu0 %v1196
    %1650 = vmatpush1.bf16.msra.mxu0 %v1195
    %1651 = vmatprep.subr.bf16.mxu0 %v1204
    %1652 = vmatpush1.bf16.msra.mxu0 %v1203
    %1653 = vmatprep.subr.bf16.mxu0 %v1212
    %1654 = vmatpush1.bf16.msra.mxu0 %v1211
    %1655 = vmatprep.subr.bf16.mxu0 %v1220
    %1656 = vmatpush1.bf16.msra.mxu0 %v1219
    %1657 = vmatprep.subr.bf16.mxu0 %v1228
    %1658 = vmatpush1.bf16.msra.mxu0 %v1227
    %1659 = vmatprep.subr.bf16.mxu0 %v1236
    %1660 = vmatpush1.bf16.msra.mxu0 %v1235
    %1661 = vmatprep.subr.bf16.mxu0 %v1244
    %1662 = vmatpush1.bf16.msra.mxu0 %v1243
    %1663 = vmatprep.subr.bf16.mxu0 %v1252
    %1664 = vmatpush1.bf16.msra.mxu0 %v1251
    %1665 = vmatprep.subr.bf16.mxu0 %v1260
    %1666 = vmatpush1.bf16.msra.mxu0 %v1259
    %1667 = vmatprep.mubr.bf16.mxu0 %v1130
    %1668 = vmatmul.mubr.bf16.gmra.mrb[0].mxu0 %v1129
    %v1669 = vpop.f32.mrb[0].mxu0
    %v1670 = vadd.f32 0.0, %v1669
    %v1671 = vpop.f32.mrb[0].mxu0
    %v1672 = vadd.f32 0.0, %v1671
    %v1673 = vpop.f32.mrb[0].mxu0
    %v1674 = vpop.f32.mrb[0].mxu0
    %1675 = vdwg.mxu0
    %1676 = vmatprep.subr.bf16.mxu0 %v1268
    %1677 = vmatpush1.bf16.msra.mxu0 %v1267
    %1678 = vmatprep.subr.bf16.mxu0 %v1276
    %1679 = vmatpush1.bf16.msra.mxu0 %v1275
    %1680 = vmatprep.subr.bf16.mxu0 %v1284
    %1681 = vmatpush1.bf16.msra.mxu0 %v1283
    %1682 = vmatprep.subr.bf16.mxu0 %v1292
    %1683 = vmatpush1.bf16.msra.mxu0 %v1291
    %1684 = vmatprep.subr.bf16.mxu0 %v1300
    %1685 = vmatpush1.bf16.msra.mxu0 %v1299
    %1686 = vmatprep.subr.bf16.mxu0 %v1308
    %1687 = vmatpush1.bf16.msra.mxu0 %v1307
    %1688 = vmatprep.subr.bf16.mxu0 %v1316
    %1689 = vmatpush1.bf16.msra.mxu0 %v1315
    %1690 = vmatprep.subr.bf16.mxu0 %v1324
    %1691 = vmatpush1.bf16.msra.mxu0 %v1323
    %1692 = vmatprep.subr.bf16.mxu0 %v1332
    %1693 = vmatpush1.bf16.msra.mxu0 %v1331
    %1694 = vmatprep.subr.bf16.mxu0 %v1340
    %1695 = vmatpush1.bf16.msra.mxu0 %v1339
    %1696 = vmatprep.subr.bf16.mxu0 %v1348
    %1697 = vmatpush1.bf16.msra.mxu0 %v1347
    %1698 = vmatprep.subr.bf16.mxu0 %v1356
    %1699 = vmatpush1.bf16.msra.mxu0 %v1355
    %1700 = vmatprep.subr.bf16.mxu0 %v1364
    %1701 = vmatpush1.bf16.msra.mxu0 %v1363
    %1702 = vmatprep.subr.bf16.mxu0 %v1372
    %1703 = vmatpush1.bf16.msra.mxu0 %v1371
    %1704 = vmatprep.subr.bf16.mxu0 %v1380
    %1705 = vmatpush1.bf16.msra.mxu0 %v1379
    %1706 = vmatprep.subr.bf16.mxu0 %v1388
    %1707 = vmatpush1.bf16.msra.mxu0 %v1387
    %1708 = vmatprep.mubr.bf16.mxu0 %v1132
    %1709 = vmatmul.mubr.bf16.gmra.mrb[0].mxu0 %v1131
    %v1710 = vpop.f32.mrb[0].mxu0
    %v1711 = vadd.f32 %v1670, %v1710
    %v1712 = vpop.f32.mrb[0].mxu0
    %v1713 = vadd.f32 %v1672, %v1712
    %v1714 = vpop.f32.mrb[0].mxu0
    %v1715 = vpop.f32.mrb[0].mxu0
    %1716 = vdwg.mxu0
    %v1717 = vrot.slane %v1465, 4
    %v1718 = vadd.f32 %v1465, %v1717
    %v1719 = vrot.slane %v1718, 2
    %v1720 = vadd.f32 %v1718, %v1719
    %v1721 = vrot.slane %v1720, 1
    %v1722 = vadd.f32 %v1720, %v1721
    %v1723 = vrot.slane %v1467, 4
    %v1724 = vadd.f32 %v1467, %v1723
    %v1725 = vrot.slane %v1724, 2
    %v1726 = vadd.f32 %v1724, %v1725
    %v1727 = vrot.slane %v1726, 1
    %v1728 = vadd.f32 %v1726, %v1727
    %v1729 = vrot.slane %v1547, 4
    %v1730 = vadd.f32 %v1547, %v1729
    %v1731 = vrot.slane %v1730, 2
    %v1732 = vadd.f32 %v1730, %v1731
    %v1733 = vrot.slane %v1732, 1
    %v1734 = vadd.f32 %v1732, %v1733
    %v1735 = vrot.slane %v1549, 4
    %v1736 = vadd.f32 %v1549, %v1735
    %v1737 = vrot.slane %v1736, 2
    %v1738 = vadd.f32 %v1736, %v1737
    %v1739 = vrot.slane %v1738, 1
    %v1740 = vadd.f32 %v1738, %v1739
    %v1741 = vrot.slane %v1629, 4
    %v1742 = vadd.f32 %v1629, %v1741
    %v1743 = vrot.slane %v1742, 2
    %v1744 = vadd.f32 %v1742, %v1743
    %v1745 = vrot.slane %v1744, 1
    %v1746 = vadd.f32 %v1744, %v1745
    %v1747 = vrot.slane %v1631, 4
    %v1748 = vadd.f32 %v1631, %v1747
    %v1749 = vrot.slane %v1748, 2
    %v1750 = vadd.f32 %v1748, %v1749
    %v1751 = vrot.slane %v1750, 1
    %v1752 = vadd.f32 %v1750, %v1751
    %v1753 = vrot.slane %v1711, 4
    %v1754 = vadd.f32 %v1711, %v1753
    %v1755 = vrot.slane %v1754, 2
    %v1756 = vadd.f32 %v1754, %v1755
    %v1757 = vrot.slane %v1756, 1
    %v1758 = vadd.f32 %v1756, %v1757
    %v1759 = vrot.slane %v1713, 4
    %v1760 = vadd.f32 %v1713, %v1759
    %v1761 = vrot.slane %v1760, 2
    %v1762 = vadd.f32 %v1760, %v1761
    %v1763 = vrot.slane %v1762, 1
    %v1764 = vadd.f32 %v1762, %v1763
    %v1765 = vmul.f32 %v1722, %v438
    %v1766 = vmul.f32 %v1728, %v438
    %v1767 = vmul.f32 %v1734, %v438
    %v1768 = vmul.f32 %v1740, %v438
    %v1769 = vmul.f32 %v1746, %v438
    %v1770 = vmul.f32 %v1752, %v438
    %v1771 = vmul.f32 %v1758, %v438
    %v1772 = vmul.f32 %v1764, %v438
    %v1773 = vsub.f32 %v1465, %v1765
    %v1774 = vsub.f32 %v1467, %v1766
    %v1775 = vsub.f32 %v1547, %v1767
    %v1776 = vsub.f32 %v1549, %v1768
    %v1777 = vsub.f32 %v1629, %v1769
    %v1778 = vsub.f32 %v1631, %v1770
    %v1779 = vsub.f32 %v1711, %v1771
    %v1780 = vsub.f32 %v1713, %v1772
    %v1781 = vmul.f32 %v1773, %v1773
    %v1782 = vmul.f32 %v1774, %v1774
    %v1783 = vmul.f32 %v1775, %v1775
    %v1784 = vmul.f32 %v1776, %v1776
    %v1785 = vmul.f32 %v1777, %v1777
    %v1786 = vmul.f32 %v1778, %v1778
    %v1787 = vmul.f32 %v1779, %v1779
    %v1788 = vmul.f32 %v1780, %v1780
    %v1789 = vrot.slane %v1781, 4
    %v1790 = vadd.f32 %v1781, %v1789
    %v1791 = vrot.slane %v1790, 2
    %v1792 = vadd.f32 %v1790, %v1791
    %v1793 = vrot.slane %v1792, 1
    %v1794 = vadd.f32 %v1792, %v1793
    %v1795 = vrot.slane %v1782, 4
    %v1796 = vadd.f32 %v1782, %v1795
    %v1797 = vrot.slane %v1796, 2
    %v1798 = vadd.f32 %v1796, %v1797
    %v1799 = vrot.slane %v1798, 1
    %v1800 = vadd.f32 %v1798, %v1799
    %v1801 = vrot.slane %v1783, 4
    %v1802 = vadd.f32 %v1783, %v1801
    %v1803 = vrot.slane %v1802, 2
    %v1804 = vadd.f32 %v1802, %v1803
    %v1805 = vrot.slane %v1804, 1
    %v1806 = vadd.f32 %v1804, %v1805
    %v1807 = vrot.slane %v1784, 4
    %v1808 = vadd.f32 %v1784, %v1807
    %v1809 = vrot.slane %v1808, 2
    %v1810 = vadd.f32 %v1808, %v1809
    %v1811 = vrot.slane %v1810, 1
    %v1812 = vadd.f32 %v1810, %v1811
    %v1813 = vrot.slane %v1785, 4
    %v1814 = vadd.f32 %v1785, %v1813
    %v1815 = vrot.slane %v1814, 2
    %v1816 = vadd.f32 %v1814, %v1815
    %v1817 = vrot.slane %v1816, 1
    %v1818 = vadd.f32 %v1816, %v1817
    %v1819 = vrot.slane %v1786, 4
    %v1820 = vadd.f32 %v1786, %v1819
    %v1821 = vrot.slane %v1820, 2
    %v1822 = vadd.f32 %v1820, %v1821
    %v1823 = vrot.slane %v1822, 1
    %v1824 = vadd.f32 %v1822, %v1823
    %v1825 = vrot.slane %v1787, 4
    %v1826 = vadd.f32 %v1787, %v1825
    %v1827 = vrot.slane %v1826, 2
    %v1828 = vadd.f32 %v1826, %v1827
    %v1829 = vrot.slane %v1828, 1
    %v1830 = vadd.f32 %v1828, %v1829
    %v1831 = vrot.slane %v1788, 4
    %v1832 = vadd.f32 %v1788, %v1831
    %v1833 = vrot.slane %v1832, 2
    %v1834 = vadd.f32 %v1832, %v1833
    %v1835 = vrot.slane %v1834, 1
    %v1836 = vadd.f32 %v1834, %v1835
    %v1837 = vmul.f32 %v1794, %v438
    %v1838 = vmul.f32 %v1800, %v438
    %v1839 = vmul.f32 %v1806, %v438
    %v1840 = vmul.f32 %v1812, %v438
    %v1841 = vmul.f32 %v1818, %v438
    %v1842 = vmul.f32 %v1824, %v438
    %v1843 = vmul.f32 %v1830, %v438
    %v1844 = vmul.f32 %v1836, %v438
    %v1845 = vadd.f32 %v1837, 0.8
    %v1846 = vadd.f32 %v1838, 0.8
    %v1847 = vadd.f32 %v1839, 0.8
    %v1848 = vadd.f32 %v1840, 0.8
    %v1849 = vadd.f32 %v1841, 0.8
    %v1850 = vadd.f32 %v1842, 0.8
    %v1851 = vadd.f32 %v1843, 0.8
    %v1852 = vadd.f32 %v1844, 0.8
    %v1853 = vrsqrt.pop %v1845
    %v1854 = vrsqrt.pop %v1846
    %v1855 = vrsqrt.pop %v1847
    %v1856 = vrsqrt.pop %v1848
    %v1857 = vrsqrt.pop %v1849
    %v1858 = vrsqrt.pop %v1850
    %v1859 = vrsqrt.pop %v1851
    %v1860 = vrsqrt.pop %v1852
    %v1861 = vld [vmem:[%s10] sm:$0xff]
    %v1863 = vlaneseq
    %v1864 = vshrl.u32 %v1863, 7
    %v1865 = vsub.s32 0, %v1864
    %v1866 = vrot.slane %v1861, %v1865
    %v1867 = vlaneseq
    %v1868 = vshrl.u32 %v1867, 7
    %v1869 = vsub.s32 1, %v1868
    %v1870 = vrot.slane %v1861, %v1869
    %v1871 = vlaneseq
    %v1872 = vshrl.u32 %v1871, 7
    %v1873 = vsub.s32 2, %v1872
    %v1874 = vrot.slane %v1861, %v1873
    %v1875 = vlaneseq
    %v1876 = vshrl.u32 %v1875, 7
    %v1877 = vsub.s32 3, %v1876
    %v1878 = vrot.slane %v1861, %v1877
    %v1879 = vlaneseq
    %v1880 = vshrl.u32 %v1879, 7
    %v1881 = vsub.s32 4, %v1880
    %v1882 = vrot.slane %v1861, %v1881
    %v1883 = vlaneseq
    %v1884 = vshrl.u32 %v1883, 7
    %v1885 = vsub.s32 5, %v1884
    %v1886 = vrot.slane %v1861, %v1885
    %v1887 = vlaneseq
    %v1888 = vshrl.u32 %v1887, 7
    %v1889 = vsub.s32 6, %v1888
    %v1890 = vrot.slane %v1861, %v1889
    %v1891 = vlaneseq
    %v1892 = vshrl.u32 %v1891, 7
    %v1893 = vsub.s32 7, %v1892
    %v1894 = vrot.slane %v1861, %v1893
    %v1903 = vmul.f32 %v1853, %v1866
    %v1904 = vmul.f32 %v1854, %v1870
    %v1905 = vmul.f32 %v1855, %v1874
    %v1906 = vmul.f32 %v1856, %v1878
    %v1907 = vmul.f32 %v1857, %v1882
    %v1908 = vmul.f32 %v1858, %v1886
    %v1909 = vmul.f32 %v1859, %v1890
    %v1910 = vmul.f32 %v1860, %v1894
    %v1911 = vlaneseq
    %v1912 = vshrl.u32 %v1911, 7
    %v1913 = vsub.s32 0, %v1912
    %v1914 = vrot.slane %v1903, %v1913
    %v1915 = vlaneseq
    %v1916 = vshrl.u32 %v1915, 7
    %v1917 = vsub.s32 0, %v1916
    %v1918 = vrot.slane %v1904, %v1917
    %v1919 = vlaneseq
    %v1920 = vshrl.u32 %v1919, 7
    %v1921 = vsub.s32 0, %v1920
    %v1922 = vrot.slane %v1905, %v1921
    %v1923 = vlaneseq
    %v1924 = vshrl.u32 %v1923, 7
    %v1925 = vsub.s32 0, %v1924
    %v1926 = vrot.slane %v1906, %v1925
    %v1927 = vlaneseq
    %v1928 = vshrl.u32 %v1927, 7
    %v1929 = vsub.s32 0, %v1928
    %v1930 = vrot.slane %v1907, %v1929
    %v1931 = vlaneseq
    %v1932 = vshrl.u32 %v1931, 7
    %v1933 = vsub.s32 0, %v1932
    %v1934 = vrot.slane %v1908, %v1933
    %v1935 = vlaneseq
    %v1936 = vshrl.u32 %v1935, 7
    %v1937 = vsub.s32 0, %v1936
    %v1938 = vrot.slane %v1909, %v1937
    %v1939 = vlaneseq
    %v1940 = vshrl.u32 %v1939, 7
    %v1941 = vsub.s32 0, %v1940
    %v1942 = vrot.slane %v1910, %v1941
    %v1943 = vmul.f32 %v1773, %v1914
    %v1944 = vmul.f32 %v1774, %v1918
    %v1945 = vmul.f32 %v1775, %v1922
    %v1946 = vmul.f32 %v1776, %v1926
    %v1947 = vmul.f32 %v1777, %v1930
    %v1948 = vmul.f32 %v1778, %v1934
    %v1949 = vmul.f32 %v1779, %v1938
    %v1950 = vmul.f32 %v1780, %v1942
    %v1951 = vld [vmem:[%s11] sm:$0xff]
    %v1953 = vlaneseq
    %v1954 = vshrl.u32 %v1953, 7
    %v1955 = vsub.s32 0, %v1954
    %v1956 = vrot.slane %v1951, %v1955
    %v1957 = vlaneseq
    %v1958 = vshrl.u32 %v1957, 7
    %v1959 = vsub.s32 1, %v1958
    %v1960 = vrot.slane %v1951, %v1959
    %v1961 = vlaneseq
    %v1962 = vshrl.u32 %v1961, 7
    %v1963 = vsub.s32 2, %v1962
    %v1964 = vrot.slane %v1951, %v1963
    %v1965 = vlaneseq
    %v1966 = vshrl.u32 %v1965, 7
    %v1967 = vsub.s32 3, %v1966
    %v1968 = vrot.slane %v1951, %v1967
    %v1969 = vlaneseq
    %v1970 = vshrl.u32 %v1969, 7
    %v1971 = vsub.s32 4, %v1970
    %v1972 = vrot.slane %v1951, %v1971
    %v1973 = vlaneseq
    %v1974 = vshrl.u32 %v1973, 7
    %v1975 = vsub.s32 5, %v1974
    %v1976 = vrot.slane %v1951, %v1975
    %v1977 = vlaneseq
    %v1978 = vshrl.u32 %v1977, 7
    %v1979 = vsub.s32 6, %v1978
    %v1980 = vrot.slane %v1951, %v1979
    %v1981 = vlaneseq
    %v1982 = vshrl.u32 %v1981, 7
    %v1983 = vsub.s32 7, %v1982
    %v1984 = vrot.slane %v1951, %v1983
    %v1993 = vadd.f32 %v1943, %v1956
    %v1994 = vadd.f32 %v1944, %v1960
    %v1995 = vadd.f32 %v1945, %v1964
    %v1996 = vadd.f32 %v1946, %v1968
    %v1997 = vadd.f32 %v1947, %v1972
    %v1998 = vadd.f32 %v1948, %v1976
    %v1999 = vadd.f32 %v1949, %v1980
    %v2000 = vadd.f32 %v1950, %v1984
    %v2001 = vmul.f32 %v1993, 0.2
    %v2002 = vmul.f32 %v1994, 0.2
    %v2003 = vmul.f32 %v1995, 0.2
    %v2004 = vmul.f32 %v1996, 0.2
    %v2005 = vmul.f32 %v1997, 0.2
    %v2006 = vmul.f32 %v1998, 0.2
    %v2007 = vmul.f32 %v1999, 0.2
    %v2008 = vmul.f32 %v2000, 0.2
    %v2009 = vmax.f32 %v1993, %v2001
    %v2010 = vmax.f32 %v1994, %v2002
    %v2011 = vmax.f32 %v1995, %v2003
    %v2012 = vmax.f32 %v1996, %v2004
    %v2013 = vmax.f32 %v1997, %v2005
    %v2014 = vmax.f32 %v1998, %v2006
    %v2015 = vmax.f32 %v1999, %v2007
    %v2016 = vmax.f32 %v2000, %v2008
    %s2017 = smul.u32 4, 128
    %s2018 = smul.u32 %s2017, 2
    %s2019 = sshll.u32 %s2018, 4
    %2020 = dma.done %s166, %s2019
    %v2021 = vpack.c.bf16 %v2009, %v2009
    %v2022 = vpack.c.bf16 %v2010, %v2010
    %v2023 = vpack.c.bf16 %v2011, %v2011
    %v2024 = vpack.c.bf16 %v2012, %v2012
    %v2025 = vpack.c.bf16 %v2013, %v2013
    %v2026 = vpack.c.bf16 %v2014, %v2014
    %v2027 = vpack.c.bf16 %v2015, %v2015
    %v2028 = vpack.c.bf16 %v2016, %v2016
    %v2029 = vld [vmem:[#allocation3] sm:$0xff]
    %v2030 = vld [vmem:[#allocation3 + $0x8] sm:$0xff]
    %v2031 = vld [vmem:[#allocation3 + $0x10] sm:$0xff]
    %v2032 = vld [vmem:[#allocation3 + $0x18] sm:$0xff]
    %v2033 = vld [vmem:[#allocation3 + $0x20] sm:$0xff]
    %v2034 = vld [vmem:[#allocation3 + $0x28] sm:$0xff]
    %v2035 = vld [vmem:[#allocation3 + $0x30] sm:$0xff]
    %v2036 = vld [vmem:[#allocation3 + $0x38] sm:$0xff]
    %v2037 = vld [vmem:[#allocation3 + $0x40] sm:$0xff]
    %v2038 = vld [vmem:[#allocation3 + $0x48] sm:$0xff]
    %v2039 = vld [vmem:[#allocation3 + $0x50] sm:$0xff]
    %v2040 = vld [vmem:[#allocation3 + $0x58] sm:$0xff]
    %v2041 = vld [vmem:[#allocation3 + $0x60] sm:$0xff]
    %v2042 = vld [vmem:[#allocation3 + $0x68] sm:$0xff]
    %v2043 = vld [vmem:[#allocation3 + $0x70] sm:$0xff]
    %v2044 = vld [vmem:[#allocation3 + $0x78] sm:$0xff]
    %v2045 = vld [vmem:[#allocation3 + $0x80] sm:$0xff]
    %v2046 = vld [vmem:[#allocation3 + $0x88] sm:$0xff]
    %v2047 = vld [vmem:[#allocation3 + $0x90] sm:$0xff]
    %v2048 = vld [vmem:[#allocation3 + $0x98] sm:$0xff]
    %v2049 = vld [vmem:[#allocation3 + $0xa0] sm:$0xff]
    %v2050 = vld [vmem:[#allocation3 + $0xa8] sm:$0xff]
    %v2051 = vld [vmem:[#allocation3 + $0xb0] sm:$0xff]
    %v2052 = vld [vmem:[#allocation3 + $0xb8] sm:$0xff]
    %v2053 = vld [vmem:[#allocation3 + $0xc0] sm:$0xff]
    %v2054 = vld [vmem:[#allocation3 + $0xc8] sm:$0xff]
    %v2055 = vld [vmem:[#allocation3 + $0xd0] sm:$0xff]
    %v2056 = vld [vmem:[#allocation3 + $0xd8] sm:$0xff]
    %v2057 = vld [vmem:[#allocation3 + $0xe0] sm:$0xff]
    %v2058 = vld [vmem:[#allocation3 + $0xe8] sm:$0xff]
    %v2059 = vld [vmem:[#allocation3 + $0xf0] sm:$0xff]
    %v2060 = vld [vmem:[#allocation3 + $0xf8] sm:$0xff]
    %v2061 = vld [vmem:[#allocation3 + $0x100] sm:$0xff]
    %v2062 = vld [vmem:[#allocation3 + $0x108] sm:$0xff]
    %v2063 = vld [vmem:[#allocation3 + $0x110] sm:$0xff]
    %v2064 = vld [vmem:[#allocation3 + $0x118] sm:$0xff]
    %v2065 = vld [vmem:[#allocation3 + $0x120] sm:$0xff]
    %v2066 = vld [vmem:[#allocation3 + $0x128] sm:$0xff]
    %v2067 = vld [vmem:[#allocation3 + $0x130] sm:$0xff]
    %v2068 = vld [vmem:[#allocation3 + $0x138] sm:$0xff]
    %v2069 = vld [vmem:[#allocation3 + $0x140] sm:$0xff]
    %v2070 = vld [vmem:[#allocation3 + $0x148] sm:$0xff]
    %v2071 = vld [vmem:[#allocation3 + $0x150] sm:$0xff]
    %v2072 = vld [vmem:[#allocation3 + $0x158] sm:$0xff]
    %v2073 = vld [vmem:[#allocation3 + $0x160] sm:$0xff]
    %v2074 = vld [vmem:[#allocation3 + $0x168] sm:$0xff]
    %v2075 = vld [vmem:[#allocation3 + $0x170] sm:$0xff]
    %v2076 = vld [vmem:[#allocation3 + $0x178] sm:$0xff]
    %v2077 = vld [vmem:[#allocation3 + $0x180] sm:$0xff]
    %v2078 = vld [vmem:[#allocation3 + $0x188] sm:$0xff]
    %v2079 = vld [vmem:[#allocation3 + $0x190] sm:$0xff]
    %v2080 = vld [vmem:[#allocation3 + $0x198] sm:$0xff]
    %v2081 = vld [vmem:[#allocation3 + $0x1a0] sm:$0xff]
    %v2082 = vld [vmem:[#allocation3 + $0x1a8] sm:$0xff]
    %v2083 = vld [vmem:[#allocation3 + $0x1b0] sm:$0xff]
    %v2084 = vld [vmem:[#allocation3 + $0x1b8] sm:$0xff]
    %v2085 = vld [vmem:[#allocation3 + $0x1c0] sm:$0xff]
    %v2086 = vld [vmem:[#allocation3 + $0x1c8] sm:$0xff]
    %v2087 = vld [vmem:[#allocation3 + $0x1d0] sm:$0xff]
    %v2088 = vld [vmem:[#allocation3 + $0x1d8] sm:$0xff]
    %v2089 = vld [vmem:[#allocation3 + $0x1e0] sm:$0xff]
    %v2090 = vld [vmem:[#allocation3 + $0x1e8] sm:$0xff]
    %v2091 = vld [vmem:[#allocation3 + $0x1f0] sm:$0xff]
    %v2092 = vld [vmem:[#allocation3 + $0x1f8] sm:$0xff]
    %v2093 = vld [vmem:[#allocation3 + $0x200] sm:$0xff]
    %v2094 = vld [vmem:[#allocation3 + $0x208] sm:$0xff]
    %v2095 = vld [vmem:[#allocation3 + $0x210] sm:$0xff]
    %v2096 = vld [vmem:[#allocation3 + $0x218] sm:$0xff]
    %v2097 = vld [vmem:[#allocation3 + $0x220] sm:$0xff]
    %v2098 = vld [vmem:[#allocation3 + $0x228] sm:$0xff]
    %v2099 = vld [vmem:[#allocation3 + $0x230] sm:$0xff]
    %v2100 = vld [vmem:[#allocation3 + $0x238] sm:$0xff]
    %v2101 = vld [vmem:[#allocation3 + $0x240] sm:$0xff]
    %v2102 = vld [vmem:[#allocation3 + $0x248] sm:$0xff]
    %v2103 = vld [vmem:[#allocation3 + $0x250] sm:$0xff]
    %v2104 = vld [vmem:[#allocation3 + $0x258] sm:$0xff]
    %v2105 = vld [vmem:[#allocation3 + $0x260] sm:$0xff]
    %v2106 = vld [vmem:[#allocation3 + $0x268] sm:$0xff]
    %v2107 = vld [vmem:[#allocation3 + $0x270] sm:$0xff]
    %v2108 = vld [vmem:[#allocation3 + $0x278] sm:$0xff]
    %v2109 = vld [vmem:[#allocation3 + $0x280] sm:$0xff]
    %v2110 = vld [vmem:[#allocation3 + $0x288] sm:$0xff]
    %v2111 = vld [vmem:[#allocation3 + $0x290] sm:$0xff]
    %v2112 = vld [vmem:[#allocation3 + $0x298] sm:$0xff]
    %v2113 = vld [vmem:[#allocation3 + $0x2a0] sm:$0xff]
    %v2114 = vld [vmem:[#allocation3 + $0x2a8] sm:$0xff]
    %v2115 = vld [vmem:[#allocation3 + $0x2b0] sm:$0xff]
    %v2116 = vld [vmem:[#allocation3 + $0x2b8] sm:$0xff]
    %v2117 = vld [vmem:[#allocation3 + $0x2c0] sm:$0xff]
    %v2118 = vld [vmem:[#allocation3 + $0x2c8] sm:$0xff]
    %v2119 = vld [vmem:[#allocation3 + $0x2d0] sm:$0xff]
    %v2120 = vld [vmem:[#allocation3 + $0x2d8] sm:$0xff]
    %v2121 = vld [vmem:[#allocation3 + $0x2e0] sm:$0xff]
    %v2122 = vld [vmem:[#allocation3 + $0x2e8] sm:$0xff]
    %v2123 = vld [vmem:[#allocation3 + $0x2f0] sm:$0xff]
    %v2124 = vld [vmem:[#allocation3 + $0x2f8] sm:$0xff]
    %v2125 = vld [vmem:[#allocation3 + $0x300] sm:$0xff]
    %v2126 = vld [vmem:[#allocation3 + $0x308] sm:$0xff]
    %v2127 = vld [vmem:[#allocation3 + $0x310] sm:$0xff]
    %v2128 = vld [vmem:[#allocation3 + $0x318] sm:$0xff]
    %v2129 = vld [vmem:[#allocation3 + $0x320] sm:$0xff]
    %v2130 = vld [vmem:[#allocation3 + $0x328] sm:$0xff]
    %v2131 = vld [vmem:[#allocation3 + $0x330] sm:$0xff]
    %v2132 = vld [vmem:[#allocation3 + $0x338] sm:$0xff]
    %v2133 = vld [vmem:[#allocation3 + $0x340] sm:$0xff]
    %v2134 = vld [vmem:[#allocation3 + $0x348] sm:$0xff]
    %v2135 = vld [vmem:[#allocation3 + $0x350] sm:$0xff]
    %v2136 = vld [vmem:[#allocation3 + $0x358] sm:$0xff]
    %v2137 = vld [vmem:[#allocation3 + $0x360] sm:$0xff]
    %v2138 = vld [vmem:[#allocation3 + $0x368] sm:$0xff]
    %v2139 = vld [vmem:[#allocation3 + $0x370] sm:$0xff]
    %v2140 = vld [vmem:[#allocation3 + $0x378] sm:$0xff]
    %v2141 = vld [vmem:[#allocation3 + $0x380] sm:$0xff]
    %v2142 = vld [vmem:[#allocation3 + $0x388] sm:$0xff]
    %v2143 = vld [vmem:[#allocation3 + $0x390] sm:$0xff]
    %v2144 = vld [vmem:[#allocation3 + $0x398] sm:$0xff]
    %v2145 = vld [vmem:[#allocation3 + $0x3a0] sm:$0xff]
    %v2146 = vld [vmem:[#allocation3 + $0x3a8] sm:$0xff]
    %v2147 = vld [vmem:[#allocation3 + $0x3b0] sm:$0xff]
    %v2148 = vld [vmem:[#allocation3 + $0x3b8] sm:$0xff]
    %v2149 = vld [vmem:[#allocation3 + $0x3c0] sm:$0xff]
    %v2150 = vld [vmem:[#allocation3 + $0x3c8] sm:$0xff]
    %v2151 = vld [vmem:[#allocation3 + $0x3d0] sm:$0xff]
    %v2152 = vld [vmem:[#allocation3 + $0x3d8] sm:$0xff]
    %v2153 = vld [vmem:[#allocation3 + $0x3e0] sm:$0xff]
    %v2154 = vld [vmem:[#allocation3 + $0x3e8] sm:$0xff]
    %v2155 = vld [vmem:[#allocation3 + $0x3f0] sm:$0xff]
    %v2156 = vld [vmem:[#allocation3 + $0x3f8] sm:$0xff]
    %v2157 = vld [vmem:[%s13] sm:$0x3]
    %v2159 = vlaneseq
    %v2160 = vshrl.u32 %v2159, 7
    %v2161 = vsub.s32 0, %v2160
    %v2162 = vrot.slane %v2157, %v2161
    %v2163 = vlaneseq
    %v2164 = vshrl.u32 %v2163, 7
    %v2165 = vsub.s32 1, %v2164
    %v2166 = vrot.slane %v2157, %v2165
    %2169 = vmatprep.subr.bf16.mxu0 %v2030
    %2170 = vmatpush1.bf16.msra.mxu0 %v2029
    %2171 = vmatprep.subr.bf16.mxu0 %v2032
    %2172 = vmatpush1.bf16.msra.mxu0 %v2031
    %2173 = vmatprep.subr.bf16.mxu0 %v2034
    %2174 = vmatpush1.bf16.msra.mxu0 %v2033
    %2175 = vmatprep.subr.bf16.mxu0 %v2036
    %2176 = vmatpush1.bf16.msra.mxu0 %v2035
    %2177 = vmatprep.subr.bf16.mxu0 %v2038
    %2178 = vmatpush1.bf16.msra.mxu0 %v2037
    %2179 = vmatprep.subr.bf16.mxu0 %v2040
    %2180 = vmatpush1.bf16.msra.mxu0 %v2039
    %2181 = vmatprep.subr.bf16.mxu0 %v2042
    %2182 = vmatpush1.bf16.msra.mxu0 %v2041
    %2183 = vmatprep.subr.bf16.mxu0 %v2044
    %2184 = vmatpush1.bf16.msra.mxu0 %v2043
    %2185 = vmatprep.subr.bf16.mxu0 %v2046
    %2186 = vmatpush1.bf16.msra.mxu0 %v2045
    %2187 = vmatprep.subr.bf16.mxu0 %v2048
    %2188 = vmatpush1.bf16.msra.mxu0 %v2047
    %2189 = vmatprep.subr.bf16.mxu0 %v2050
    %2190 = vmatpush1.bf16.msra.mxu0 %v2049
    %2191 = vmatprep.subr.bf16.mxu0 %v2052
    %2192 = vmatpush1.bf16.msra.mxu0 %v2051
    %2193 = vmatprep.subr.bf16.mxu0 %v2054
    %2194 = vmatpush1.bf16.msra.mxu0 %v2053
    %2195 = vmatprep.subr.bf16.mxu0 %v2056
    %2196 = vmatpush1.bf16.msra.mxu0 %v2055
    %2197 = vmatprep.subr.bf16.mxu0 %v2058
    %2198 = vmatpush1.bf16.msra.mxu0 %v2057
    %2199 = vmatprep.subr.bf16.mxu0 %v2060
    %2200 = vmatpush1.bf16.msra.mxu0 %v2059
    %2201 = vmatprep.mubr.bf16.mxu0 %v2022
    %2202 = vmatmul.mubr.bf16.gmra.mrb[0].mxu0 %v2021
    %v2203 = vpop.f32.mrb[0].mxu0
    %v2204 = vadd.f32 %v2162, %v2203
    %v2205 = vpop.f32.mrb[0].mxu0
    %v2206 = vadd.f32 %v2166, %v2205
    %v2207 = vpop.f32.mrb[0].mxu0
    %v2208 = vpop.f32.mrb[0].mxu0
    %2209 = vdwg.mxu0
    %2210 = vmatprep.subr.bf16.mxu0 %v2062
    %2211 = vmatpush1.bf16.msra.mxu0 %v2061
    %2212 = vmatprep.subr.bf16.mxu0 %v2064
    %2213 = vmatpush1.bf16.msra.mxu0 %v2063
    %2214 = vmatprep.subr.bf16.mxu0 %v2066
    %2215 = vmatpush1.bf16.msra.mxu0 %v2065
    %2216 = vmatprep.subr.bf16.mxu0 %v2068
    %2217 = vmatpush1.bf16.msra.mxu0 %v2067
    %2218 = vmatprep.subr.bf16.mxu0 %v2070
    %2219 = vmatpush1.bf16.msra.mxu0 %v2069
    %2220 = vmatprep.subr.bf16.mxu0 %v2072
    %2221 = vmatpush1.bf16.msra.mxu0 %v2071
    %2222 = vmatprep.subr.bf16.mxu0 %v2074
    %2223 = vmatpush1.bf16.msra.mxu0 %v2073
    %2224 = vmatprep.subr.bf16.mxu0 %v2076
    %2225 = vmatpush1.bf16.msra.mxu0 %v2075
    %2226 = vmatprep.subr.bf16.mxu0 %v2078
    %2227 = vmatpush1.bf16.msra.mxu0 %v2077
    %2228 = vmatprep.subr.bf16.mxu0 %v2080
    %2229 = vmatpush1.bf16.msra.mxu0 %v2079
    %2230 = vmatprep.subr.bf16.mxu0 %v2082
    %2231 = vmatpush1.bf16.msra.mxu0 %v2081
    %2232 = vmatprep.subr.bf16.mxu0 %v2084
    %2233 = vmatpush1.bf16.msra.mxu0 %v2083
    %2234 = vmatprep.subr.bf16.mxu0 %v2086
    %2235 = vmatpush1.bf16.msra.mxu0 %v2085
    %2236 = vmatprep.subr.bf16.mxu0 %v2088
    %2237 = vmatpush1.bf16.msra.mxu0 %v2087
    %2238 = vmatprep.subr.bf16.mxu0 %v2090
    %2239 = vmatpush1.bf16.msra.mxu0 %v2089
    %2240 = vmatprep.subr.bf16.mxu0 %v2092
    %2241 = vmatpush1.bf16.msra.mxu0 %v2091
    %2242 = vmatprep.mubr.bf16.mxu0 %v2024
    %2243 = vmatmul.mubr.bf16.gmra.mrb[0].mxu0 %v2023
    %v2244 = vpop.f32.mrb[0].mxu0
    %v2245 = vadd.f32 %v2204, %v2244
    %v2246 = vpop.f32.mrb[0].mxu0
    %v2247 = vadd.f32 %v2206, %v2246
    %v2248 = vpop.f32.mrb[0].mxu0
    %v2249 = vpop.f32.mrb[0].mxu0
    %2250 = vdwg.mxu0
    %2251 = vmatprep.subr.bf16.mxu0 %v2094
    %2252 = vmatpush1.bf16.msra.mxu0 %v2093
    %2253 = vmatprep.subr.bf16.mxu0 %v2096
    %2254 = vmatpush1.bf16.msra.mxu0 %v2095
    %2255 = vmatprep.subr.bf16.mxu0 %v2098
    %2256 = vmatpush1.bf16.msra.mxu0 %v2097
    %2257 = vmatprep.subr.bf16.mxu0 %v2100
    %2258 = vmatpush1.bf16.msra.mxu0 %v2099
    %2259 = vmatprep.subr.bf16.mxu0 %v2102
    %2260 = vmatpush1.bf16.msra.mxu0 %v2101
    %2261 = vmatprep.subr.bf16.mxu0 %v2104
    %2262 = vmatpush1.bf16.msra.mxu0 %v2103
    %2263 = vmatprep.subr.bf16.mxu0 %v2106
    %2264 = vmatpush1.bf16.msra.mxu0 %v2105
    %2265 = vmatprep.subr.bf16.mxu0 %v2108
    %2266 = vmatpush1.bf16.msra.mxu0 %v2107
    %2267 = vmatprep.subr.bf16.mxu0 %v2110
    %2268 = vmatpush1.bf16.msra.mxu0 %v2109
    %2269 = vmatprep.subr.bf16.mxu0 %v2112
    %2270 = vmatpush1.bf16.msra.mxu0 %v2111
    %2271 = vmatprep.subr.bf16.mxu0 %v2114
    %2272 = vmatpush1.bf16.msra.mxu0 %v2113
    %2273 = vmatprep.subr.bf16.mxu0 %v2116
    %2274 = vmatpush1.bf16.msra.mxu0 %v2115
    %2275 = vmatprep.subr.bf16.mxu0 %v2118
    %2276 = vmatpush1.bf16.msra.mxu0 %v2117
    %2277 = vmatprep.subr.bf16.mxu0 %v2120
    %2278 = vmatpush1.bf16.msra.mxu0 %v2119
    %2279 = vmatprep.subr.bf16.mxu0 %v2122
    %2280 = vmatpush1.bf16.msra.mxu0 %v2121
    %2281 = vmatprep.subr.bf16.mxu0 %v2124
    %2282 = vmatpush1.bf16.msra.mxu0 %v2123
    %2283 = vmatprep.mubr.bf16.mxu0 %v2026
    %2284 = vmatmul.mubr.bf16.gmra.mrb[0].mxu0 %v2025
    %v2285 = vpop.f32.mrb[0].mxu0
    %v2286 = vadd.f32 %v2245, %v2285
    %v2287 = vpop.f32.mrb[0].mxu0
    %v2288 = vadd.f32 %v2247, %v2287
    %v2289 = vpop.f32.mrb[0].mxu0
    %v2290 = vpop.f32.mrb[0].mxu0
    %2291 = vdwg.mxu0
    %2292 = vmatprep.subr.bf16.mxu0 %v2126
    %2293 = vmatpush1.bf16.msra.mxu0 %v2125
    %2294 = vmatprep.subr.bf16.mxu0 %v2128
    %2295 = vmatpush1.bf16.msra.mxu0 %v2127
    %2296 = vmatprep.subr.bf16.mxu0 %v2130
    %2297 = vmatpush1.bf16.msra.mxu0 %v2129
    %2298 = vmatprep.subr.bf16.mxu0 %v2132
    %2299 = vmatpush1.bf16.msra.mxu0 %v2131
    %2300 = vmatprep.subr.bf16.mxu0 %v2134
    %2301 = vmatpush1.bf16.msra.mxu0 %v2133
    %2302 = vmatprep.subr.bf16.mxu0 %v2136
    %2303 = vmatpush1.bf16.msra.mxu0 %v2135
    %2304 = vmatprep.subr.bf16.mxu0 %v2138
    %2305 = vmatpush1.bf16.msra.mxu0 %v2137
    %2306 = vmatprep.subr.bf16.mxu0 %v2140
    %2307 = vmatpush1.bf16.msra.mxu0 %v2139
    %2308 = vmatprep.subr.bf16.mxu0 %v2142
    %2309 = vmatpush1.bf16.msra.mxu0 %v2141
    %2310 = vmatprep.subr.bf16.mxu0 %v2144
    %2311 = vmatpush1.bf16.msra.mxu0 %v2143
    %2312 = vmatprep.subr.bf16.mxu0 %v2146
    %2313 = vmatpush1.bf16.msra.mxu0 %v2145
    %2314 = vmatprep.subr.bf16.mxu0 %v2148
    %2315 = vmatpush1.bf16.msra.mxu0 %v2147
    %2316 = vmatprep.subr.bf16.mxu0 %v2150
    %2317 = vmatpush1.bf16.msra.mxu0 %v2149
    %2318 = vmatprep.subr.bf16.mxu0 %v2152
    %2319 = vmatpush1.bf16.msra.mxu0 %v2151
    %2320 = vmatprep.subr.bf16.mxu0 %v2154
    %2321 = vmatpush1.bf16.msra.mxu0 %v2153
    %2322 = vmatprep.subr.bf16.mxu0 %v2156
    %2323 = vmatpush1.bf16.msra.mxu0 %v2155
    %2324 = vmatprep.mubr.bf16.mxu0 %v2028
    %2325 = vmatmul.mubr.bf16.gmra.mrb[0].mxu0 %v2027
    %v2326 = vpop.f32.mrb[0].mxu0
    %v2327 = vadd.f32 %v2286, %v2326
    %v2328 = vpop.f32.mrb[0].mxu0
    %v2329 = vadd.f32 %v2288, %v2328
    %v2330 = vpop.f32.mrb[0].mxu0
    %v2331 = vpop.f32.mrb[0].mxu0
    %2332 = vdwg.mxu0
    %v2333 = vtanh.pop %v2327
    %v2334 = vtanh.pop %v2329
    %2335 = vst [vmem:[%s14] sm:$0xff] %v2333
    %2336 = vst [vmem:[%s14 + $0x8] sm:$0xff] %v2334
    // Predicated region
    $region78: #{generator_forward.1} parent=1 // pred_check
      _
    $region79: #{generator_forward.1} parent=1 // pred_check_branch
      %2338 = sbr.rel (0) target = $region81
    $region80: #{generator_forward.1} parent=1 // pred_region
      _
    $region81: #{generator_forward.1} parent=1 // pred_fallthru
      _
    // Predicated region
    $region82: #{generator_forward.1} parent=1 // pred_check
      _
    $region83: #{generator_forward.1} parent=1 // pred_check_branch
      %2340 = sbr.rel (0) target = $region85
    $region84: #{generator_forward.1} parent=1 // pred_region
      _
    $region85: #{generator_forward.1} parent=1 // pred_fallthru
      _
    %2341 = vsyncpa [#allocation6], 1
    %2342 = vsyncpa [#allocation8], 1
    %2343 = vsyncpa [#allocation11], 1
    %2344 = vsyncpa [#allocation14], 1
  %2345 = vsyncmov [#allocation4]
  %s2346 = vpop.sfrf %2345
  %p2347 = scmp.eq.s32.totalorder %s2346, 0
  %p2348 = pneg %p2347
  %2350 = shalt.err (%p2348)
  %s2351 = scalar_lea.sflag [#allocation4], 1
  %2352 = vsyncmov %s2351
  %s2353 = vpop.sfrf %2352
  %p2354 = scmp.eq.s32.totalorder %s2353, 0
  %p2355 = pneg %p2354
  %2357 = shalt.err (%p2355)

</llo_original>
